<compile_context>
chip_gen: v7x
topology: tpu7x:2x2x1
jax: 0.10.0
libtpu: 0.0.40
codegen_flags: <defaults>
</compile_context>

<pallas_src>
import functools
import math

import jax
import jax.numpy as jnp
from jax.experimental import pallas as pl
from jax.experimental.pallas import tpu as pltpu

# ---------------------------------------------------------------------------
# Model hyper-parameters (small, consistent with the module's defaults).
# ---------------------------------------------------------------------------
B = 2          # batch
S = 8          # sequence length
DIM = 32       # embedding dim
HEADS = 4      # attention heads
HEAD_DIM = DIM // HEADS
MLP_RATIO = 4
HIDDEN = DIM * MLP_RATIO
EPS = 1e-5     # nn.LayerNorm default eps
SQRT_2_OVER_PI = math.sqrt(2.0 / math.pi)


def _layernorm(v, gamma, beta):
    mu = jnp.mean(v, axis=-1, keepdims=True)
    var = jnp.mean((v - mu) ** 2, axis=-1, keepdims=True)
    return (v - mu) * jax.lax.rsqrt(var + EPS) * gamma + beta


# ---------------------------------------------------------------------------
# Kernel: the whole (B*S, D) = (16, 32) problem is one VMEM-resident block.
# ---------------------------------------------------------------------------
def transformer_block_kernel(
    x_ref,                                 # (B*S, D)  f32
    wqkv_ref, bqkv_ref,                    # (D, 3D) bf16, (1, 3D) f32
    wo_ref,                                # (D, D)  bf16  (pre-transposed)
    w1_ref, bm1_ref,                       # (D, H)  bf16, (1, H) f32
    w2_ref,                                # (H, D)  bf16
    vec_ref,                               # (6, D)  f32: g1, be1, g2, be2, bo, bm2
    o_ref,                                 # (B*S, D) f32 (aliased with x)
    *, batch, seq, heads, head_dim,
):
    f32 = jnp.float32
    bf16 = jnp.bfloat16
    dim = heads * head_dim
    rows = batch * seq

    x = x_ref[...]                         # (rows, D) f32

    vec = vec_ref[...]                     # (6, D) -- cheap sublane row slices
    g1, be1 = vec[0:1, :], vec[1:2, :]
    g2, be2 = vec[2:3, :], vec[3:4, :]
    bo, bm2 = vec[4:5, :], vec[5:6, :]

    # ----- LayerNorm1 (f32) + fused QKV projection (bf16 MXU, f32 acc) -----
    xn = _layernorm(x, g1, be1)
    qkv = jnp.dot(xn.astype(bf16), wqkv_ref[...],
                  preferred_element_type=f32) + bqkv_ref[...]     # (rows, 3D) f32

    # ----- split heads -> (heads*batch, seq, head_dim) -----------------------
    # Lane slices + leading-dim reshapes + leading concatenation only; no
    # minor-dim-splitting reshapes or tiled-dim transposes.
    def split_heads(col0):
        parts = [
            qkv[:, col0 + h * head_dim: col0 + (h + 1) * head_dim]
            .reshape(batch, seq, head_dim)
            for h in range(heads)
        ]
        return jnp.concatenate(parts, axis=0)       # index = h*batch + b

    qh = split_heads(0)
    kh = split_heads(dim)
    vh = split_heads(2 * dim)

    # ----- all-head attention: two batched einsums + softmax (f32) -----------
    scale = 1.0 / math.sqrt(head_dim)
    s = jnp.einsum("bqd,bkd->bqk", qh, kh,
                   preferred_element_type=f32) * scale            # (H*B, S, S)
    s = s - jnp.max(s, axis=-1, keepdims=True)
    p = jnp.exp(s)
    p = p * pl.reciprocal(jnp.sum(p, axis=-1, keepdims=True), approx=True)
    oh = jnp.einsum("bqk,bkd->bqd", p, vh,
                    preferred_element_type=f32)                   # (H*B, S, Dh)

    # merge heads back to (rows, D): lane-axis concat of per-head blocks
    merged = jnp.concatenate(
        [oh[h * batch:(h + 1) * batch].reshape(rows, head_dim)
         for h in range(heads)],
        axis=1)                                                   # (rows, D)

    # ----- single out-projection + residual 1 --------------------------------
    attn = jnp.dot(merged.astype(bf16), wo_ref[...],
                   preferred_element_type=f32) + bo
    x = x + attn

    # ----- LayerNorm2 + MLP (Linear -> GELU(tanh) -> Linear) + residual 2 ----
    xn2 = _layernorm(x, g2, be2)
    h1 = jnp.dot(xn2.astype(bf16), w1_ref[...],
                 preferred_element_type=f32) + bm1_ref[...]       # (rows, HIDDEN)
    # tanh-approximation GELU (EUP slot); deviation from exact erf is O(1e-3).
    h1 = 0.5 * h1 * (1.0 + jnp.tanh(SQRT_2_OVER_PI * (h1 + 0.044715 * h1 * h1 * h1)))
    mlp = jnp.dot(h1.astype(bf16), w2_ref[...],
                  preferred_element_type=f32) + bm2               # (rows, D)

    o_ref[...] = x + mlp                   # residual 2


# ---------------------------------------------------------------------------
# One-time parameter packing / bf16 weight casting (NOT in the per-call path).
# ---------------------------------------------------------------------------
def pack_params(p):
    bf16 = jnp.bfloat16
    return {
        "wqkv": jnp.concatenate([p["wq"], p["wk"], p["wv"]], axis=1).astype(bf16),  # (D, 3D)
        "bqkv": jnp.concatenate([p["bq"], p["bk"], p["bv"]], axis=1),               # (1, 3D) f32
        "wo": p["wo"].astype(bf16),                                                 # (D, D)
        "w1": p["w1"].astype(bf16),                                                 # (D, H)
        "bm1": p["bm1"],                                                            # (1, H) f32
        "w2": p["w2"].astype(bf16),                                                 # (H, D)
        "vec": jnp.concatenate([p["g1"], p["be1"], p["g2"], p["be2"],
                                p["bo"], p["bm2"]], axis=0),                        # (6, D) f32
    }


def _transformer_block_impl(x, packed):
    """x: (B, S, D) float32.  packed: output of pack_params()."""
    Bn, Sn, Dn = x.shape
    x2 = x.reshape(Bn * Sn, Dn)            # free under jit

    operands = [x2, packed["wqkv"], packed["bqkv"], packed["wo"],
                packed["w1"], packed["bm1"], packed["w2"], packed["vec"]]

    kernel = functools.partial(
        transformer_block_kernel,
        batch=Bn, seq=Sn, heads=HEADS, head_dim=Dn // HEADS,
    )

    vmem_spec = pl.BlockSpec(memory_space=pltpu.MemorySpace.VMEM)
    out = pl.pallas_call(
        kernel,
        out_shape=jax.ShapeDtypeStruct((Bn * Sn, Dn), jnp.float32),
        in_specs=[vmem_spec] * len(operands),
        out_specs=vmem_spec,
        input_output_aliases={0: 0},       # write result back into x2's buffer
    )(*operands)
    return out.reshape(Bn, Sn, Dn)


transformer_block = jax.jit(_transformer_block_impl)


# ---------------------------------------------------------------------------
# Pure-JAX f32 reference (module semantics, exact-erf GELU) for correctness.
# ---------------------------------------------------------------------------
def reference(x, p):
    def ln(v, g, b):
        mu = jnp.mean(v, axis=-1, keepdims=True)
        var = jnp.mean((v - mu) ** 2, axis=-1, keepdims=True)
        return (v - mu) / jnp.sqrt(var + EPS) * g + b

    xn = ln(x, p["g1"], p["be1"])
    q = xn @ p["wq"] + p["bq"]
    k = xn @ p["wk"] + p["bk"]
    v = xn @ p["wv"] + p["bv"]

    def split(t):  # (B,S,D) -> (B,H,S,Dh)
        return t.reshape(B, S, HEADS, HEAD_DIM).transpose(0, 2, 1, 3)

    qh, kh, vh = split(q), split(k), split(v)
    s = jnp.einsum("bhqd,bhkd->bhqk", qh, kh) / math.sqrt(HEAD_DIM)
    p_attn = jax.nn.softmax(s, axis=-1)
    o = jnp.einsum("bhqk,bhkd->bhqd", p_attn, vh)
    o = o.transpose(0, 2, 1, 3).reshape(B, S, DIM)
    attn = o @ p["wo"] + p["bo"]
    x = x + attn

    xn2 = ln(x, p["g2"], p["be2"])
    h = xn2 @ p["w1"] + p["bm1"]
    h = 0.5 * h * (1.0 + jax.lax.erf(h / math.sqrt(2.0)))
    return x + (h @ p["w2"] + p["bm2"])


def make_params(key):
    ks = jax.random.split(key, 12)
    s = 0.1
    return {
        "g1": jnp.ones((1, DIM), jnp.float32),
        "be1": jnp.zeros((1, DIM), jnp.float32),
        # PyTorch stores in_proj_weight as (3D, D) applied as x @ W.T; here we
        # directly build the transposed (D, D) mats used as x @ W.
        "wq": s * jax.random.normal(ks[0], (DIM, DIM), jnp.float32),
        "wk": s * jax.random.normal(ks[1], (DIM, DIM), jnp.float32),
        "wv": s * jax.random.normal(ks[2], (DIM, DIM), jnp.float32),
        "bq": s * jax.random.normal(ks[3], (1, DIM), jnp.float32),
        "bk": s * jax.random.normal(ks[4], (1, DIM), jnp.float32),
        "bv": s * jax.random.normal(ks[5], (1, DIM), jnp.float32),
        "wo": s * jax.random.normal(ks[6], (DIM, DIM), jnp.float32),
        "bo": s * jax.random.normal(ks[7], (1, DIM), jnp.float32),
        "g2": jnp.ones((1, DIM), jnp.float32),
        "be2": jnp.zeros((1, DIM), jnp.float32),
        "w1": s * jax.random.normal(ks[8], (DIM, HIDDEN), jnp.float32),
        "bm1": s * jax.random.normal(ks[9], (1, HIDDEN), jnp.float32),
        "w2": s * jax.random.normal(ks[10], (HIDDEN, DIM), jnp.float32),
        "bm2": s * jax.random.normal(ks[11], (1, DIM), jnp.float32),
    }


if __name__ == "__main__":
    key = jax.random.PRNGKey(0)
    kx, kp = jax.random.split(key)
    x = jax.random.normal(kx, (B, S, DIM), jnp.float32)
    params = make_params(kp)

    packed = pack_params(params)           # one-time packing + bf16 weight cast
    packed = jax.tree_util.tree_map(jax.block_until_ready, packed)

    out = transformer_block(x, packed)
    out = jax.block_until_ready(out)

    ref = reference(x, params)
    assert out.shape == (B, S, DIM)
    # bf16 MXU weights + approx softmax reciprocal + tanh-GELU => relaxed
    # tolerance vs. the pure-f32 exact-erf reference (errors observed O(1e-3)).
    err = float(jnp.max(jnp.abs(out - ref)))
    assert jnp.allclose(out, ref, atol=2e-2, rtol=2e-2), \
        f"mismatch vs reference (max abs err {err})"

    print("KERNEL_OK")
</pallas_src>

<mosaic_0001>
module attributes {stable_mosaic.version = 11 : i64} {
  func.func @transformer_block_kernel(%arg0: memref<16x32xf32, #tpu.memory_space<vmem>>, %arg1: memref<32x96xbf16, #tpu.memory_space<vmem>>, %arg2: memref<1x96xf32, #tpu.memory_space<vmem>>, %arg3: memref<32x32xbf16, #tpu.memory_space<vmem>>, %arg4: memref<32x128xbf16, #tpu.memory_space<vmem>>, %arg5: memref<1x128xf32, #tpu.memory_space<vmem>>, %arg6: memref<128x32xbf16, #tpu.memory_space<vmem>>, %arg7: memref<6x32xf32, #tpu.memory_space<vmem>>, %arg8: memref<16x32xf32, #tpu.memory_space<vmem>>) attributes {dimension_semantics = [], scalar_prefetch = 0 : i64, scratch_operands = 0 : i64, tpu.core_type = #tpu.core_type<tc>} {
    %c0 = arith.constant 0 : index
    %c0_0 = arith.constant 0 : index
    %0 = vector.load %arg0[%c0, %c0_0] : memref<16x32xf32, #tpu.memory_space<vmem>>, vector<16x32xf32>
    %c0_1 = arith.constant 0 : index
    %c0_2 = arith.constant 0 : index
    %1 = vector.load %arg7[%c0_1, %c0_2] : memref<6x32xf32, #tpu.memory_space<vmem>>, vector<6x32xf32>
    %2 = vector.extract_strided_slice %1 {offsets = [0, 0], sizes = [1, 32], strides = [1, 1]} : vector<6x32xf32> to vector<1x32xf32>
    %3 = vector.extract_strided_slice %1 {offsets = [1, 0], sizes = [1, 32], strides = [1, 1]} : vector<6x32xf32> to vector<1x32xf32>
    %4 = vector.extract_strided_slice %1 {offsets = [2, 0], sizes = [1, 32], strides = [1, 1]} : vector<6x32xf32> to vector<1x32xf32>
    %5 = vector.extract_strided_slice %1 {offsets = [3, 0], sizes = [1, 32], strides = [1, 1]} : vector<6x32xf32> to vector<1x32xf32>
    %6 = vector.extract_strided_slice %1 {offsets = [4, 0], sizes = [1, 32], strides = [1, 1]} : vector<6x32xf32> to vector<1x32xf32>
    %7 = vector.extract_strided_slice %1 {offsets = [5, 0], sizes = [1, 32], strides = [1, 1]} : vector<6x32xf32> to vector<1x32xf32>
    %cst = arith.constant dense<0.000000e+00> : vector<16xf32>
    %8 = vector.multi_reduction <add>, %0, %cst [1] : vector<16x32xf32> to vector<16xf32>
    %9 = vector.shape_cast %8 : vector<16xf32> to vector<16x1xf32>
    %cst_3 = arith.constant 3.200000e+01 : f32
    %10 = vector.broadcast %cst_3 : f32 to vector<16x1xf32>
    %11 = arith.divf %9, %10 : vector<16x1xf32>
    %12 = vector.broadcast %11 : vector<16x1xf32> to vector<16x32xf32>
    %13 = arith.subf %0, %12 : vector<16x32xf32>
    %14 = arith.mulf %13, %13 : vector<16x32xf32>
    %cst_4 = arith.constant dense<0.000000e+00> : vector<16xf32>
    %15 = vector.multi_reduction <add>, %14, %cst_4 [1] : vector<16x32xf32> to vector<16xf32>
    %16 = vector.shape_cast %15 : vector<16xf32> to vector<16x1xf32>
    %cst_5 = arith.constant 3.200000e+01 : f32
    %17 = vector.broadcast %cst_5 : f32 to vector<16x1xf32>
    %18 = arith.divf %16, %17 : vector<16x1xf32>
    %19 = vector.broadcast %11 : vector<16x1xf32> to vector<16x32xf32>
    %20 = arith.subf %0, %19 : vector<16x32xf32>
    %cst_6 = arith.constant 9.99999974E-6 : f32
    %21 = vector.broadcast %cst_6 : f32 to vector<16x1xf32>
    %22 = arith.addf %18, %21 : vector<16x1xf32>
    %23 = math.rsqrt %22 : vector<16x1xf32>
    %24 = vector.broadcast %23 : vector<16x1xf32> to vector<16x32xf32>
    %25 = arith.mulf %20, %24 : vector<16x32xf32>
    %26 = vector.broadcast %2 : vector<1x32xf32> to vector<16x32xf32>
    %27 = arith.mulf %25, %26 : vector<16x32xf32>
    %28 = vector.broadcast %3 : vector<1x32xf32> to vector<16x32xf32>
    %29 = arith.addf %27, %28 : vector<16x32xf32>
    %30 = arith.truncf %29 : vector<16x32xf32> to vector<16x32xbf16>
    %c0_7 = arith.constant 0 : index
    %c0_8 = arith.constant 0 : index
    %31 = vector.load %arg1[%c0_7, %c0_8] : memref<32x96xbf16, #tpu.memory_space<vmem>>, vector<32x96xbf16>
    %cst_9 = arith.constant dense<0.000000e+00> : vector<16x96xf32>
    %32 = tpu.matmul %30, %31, %cst_9 {dimension_numbers = #tpu.dot_dimension_numbers<[1], [0], [0], [1], [0, 0, 1, 1], [], []>} : vector<16x32xbf16>, vector<32x96xbf16>, vector<16x96xf32> -> vector<16x96xf32>
    %c0_10 = arith.constant 0 : index
    %c0_11 = arith.constant 0 : index
    %33 = vector.load %arg2[%c0_10, %c0_11] : memref<1x96xf32, #tpu.memory_space<vmem>>, vector<1x96xf32>
    %34 = vector.broadcast %33 : vector<1x96xf32> to vector<16x96xf32>
    %35 = arith.addf %32, %34 : vector<16x96xf32>
    %36 = vector.extract_strided_slice %35 {offsets = [0, 0], sizes = [16, 8], strides = [1, 1]} : vector<16x96xf32> to vector<16x8xf32>
    %37 = vector.shape_cast %36 : vector<16x8xf32> to vector<2x8x8xf32>
    %38 = vector.extract_strided_slice %35 {offsets = [0, 8], sizes = [16, 8], strides = [1, 1]} : vector<16x96xf32> to vector<16x8xf32>
    %39 = vector.shape_cast %38 : vector<16x8xf32> to vector<2x8x8xf32>
    %40 = vector.extract_strided_slice %35 {offsets = [0, 16], sizes = [16, 8], strides = [1, 1]} : vector<16x96xf32> to vector<16x8xf32>
    %41 = vector.shape_cast %40 : vector<16x8xf32> to vector<2x8x8xf32>
    %42 = vector.extract_strided_slice %35 {offsets = [0, 24], sizes = [16, 8], strides = [1, 1]} : vector<16x96xf32> to vector<16x8xf32>
    %43 = vector.shape_cast %42 : vector<16x8xf32> to vector<2x8x8xf32>
    %44 = tpu.concatenate %37, %39, %41, %43 in 0 : vector<2x8x8xf32>, vector<2x8x8xf32>, vector<2x8x8xf32>, vector<2x8x8xf32> -> vector<8x8x8xf32>
    %45 = vector.extract_strided_slice %35 {offsets = [0, 32], sizes = [16, 8], strides = [1, 1]} : vector<16x96xf32> to vector<16x8xf32>
    %46 = vector.shape_cast %45 : vector<16x8xf32> to vector<2x8x8xf32>
    %47 = vector.extract_strided_slice %35 {offsets = [0, 40], sizes = [16, 8], strides = [1, 1]} : vector<16x96xf32> to vector<16x8xf32>
    %48 = vector.shape_cast %47 : vector<16x8xf32> to vector<2x8x8xf32>
    %49 = vector.extract_strided_slice %35 {offsets = [0, 48], sizes = [16, 8], strides = [1, 1]} : vector<16x96xf32> to vector<16x8xf32>
    %50 = vector.shape_cast %49 : vector<16x8xf32> to vector<2x8x8xf32>
    %51 = vector.extract_strided_slice %35 {offsets = [0, 56], sizes = [16, 8], strides = [1, 1]} : vector<16x96xf32> to vector<16x8xf32>
    %52 = vector.shape_cast %51 : vector<16x8xf32> to vector<2x8x8xf32>
    %53 = tpu.concatenate %46, %48, %50, %52 in 0 : vector<2x8x8xf32>, vector<2x8x8xf32>, vector<2x8x8xf32>, vector<2x8x8xf32> -> vector<8x8x8xf32>
    %54 = vector.extract_strided_slice %35 {offsets = [0, 64], sizes = [16, 8], strides = [1, 1]} : vector<16x96xf32> to vector<16x8xf32>
    %55 = vector.shape_cast %54 : vector<16x8xf32> to vector<2x8x8xf32>
    %56 = vector.extract_strided_slice %35 {offsets = [0, 72], sizes = [16, 8], strides = [1, 1]} : vector<16x96xf32> to vector<16x8xf32>
    %57 = vector.shape_cast %56 : vector<16x8xf32> to vector<2x8x8xf32>
    %58 = vector.extract_strided_slice %35 {offsets = [0, 80], sizes = [16, 8], strides = [1, 1]} : vector<16x96xf32> to vector<16x8xf32>
    %59 = vector.shape_cast %58 : vector<16x8xf32> to vector<2x8x8xf32>
    %60 = vector.extract_strided_slice %35 {offsets = [0, 88], sizes = [16, 8], strides = [1, 1]} : vector<16x96xf32> to vector<16x8xf32>
    %61 = vector.shape_cast %60 : vector<16x8xf32> to vector<2x8x8xf32>
    %62 = tpu.concatenate %55, %57, %59, %61 in 0 : vector<2x8x8xf32>, vector<2x8x8xf32>, vector<2x8x8xf32>, vector<2x8x8xf32> -> vector<8x8x8xf32>
    "tpu.trace_start"() <{level = 10 : i32, message = "bqd,bkd->bqk"}> : () -> ()
    %cst_12 = arith.constant dense<0.000000e+00> : vector<8x8x8xf32>
    %63 = tpu.matmul %44, %53, %cst_12 {dimension_numbers = #tpu.dot_dimension_numbers<[2], [2], [1], [1], [0, 0, 0, 1, 1, 1], [0], [0]>} : vector<8x8x8xf32>, vector<8x8x8xf32>, vector<8x8x8xf32> -> vector<8x8x8xf32>
    "tpu.trace_stop"() : () -> ()
    %cst_13 = arith.constant 0.353553385 : f32
    %64 = vector.broadcast %cst_13 : f32 to vector<8x8x8xf32>
    %65 = arith.mulf %63, %64 : vector<8x8x8xf32>
    %cst_14 = arith.constant dense<0xFF800000> : vector<8x8xf32>
    %66 = vector.multi_reduction <maximumf>, %65, %cst_14 [2] : vector<8x8x8xf32> to vector<8x8xf32>
    %67 = vector.shape_cast %66 : vector<8x8xf32> to vector<8x8x1xf32>
    %68 = vector.broadcast %67 : vector<8x8x1xf32> to vector<8x8x8xf32>
    %69 = arith.subf %65, %68 : vector<8x8x8xf32>
    %70 = math.exp %69 : vector<8x8x8xf32>
    %cst_15 = arith.constant dense<0.000000e+00> : vector<8x8xf32>
    %71 = vector.multi_reduction <add>, %70, %cst_15 [2] : vector<8x8x8xf32> to vector<8x8xf32>
    %72 = vector.shape_cast %71 : vector<8x8xf32> to vector<8x8x1xf32>
    %73 = tpu.reciprocal %72 {approx = true} : vector<8x8x1xf32> -> vector<8x8x1xf32>
    %74 = vector.broadcast %73 : vector<8x8x1xf32> to vector<8x8x8xf32>
    %75 = arith.mulf %70, %74 : vector<8x8x8xf32>
    "tpu.trace_start"() <{level = 10 : i32, message = "bqk,bkd->bqd"}> : () -> ()
    %cst_16 = arith.constant dense<0.000000e+00> : vector<8x8x8xf32>
    %76 = tpu.matmul %75, %62, %cst_16 {dimension_numbers = #tpu.dot_dimension_numbers<[2], [1], [1], [2], [0, 0, 0, 1, 1, 2], [0], [0]>} : vector<8x8x8xf32>, vector<8x8x8xf32>, vector<8x8x8xf32> -> vector<8x8x8xf32>
    "tpu.trace_stop"() : () -> ()
    %77 = vector.extract_strided_slice %76 {offsets = [0, 0, 0], sizes = [2, 8, 8], strides = [1, 1, 1]} : vector<8x8x8xf32> to vector<2x8x8xf32>
    %78 = vector.shape_cast %77 : vector<2x8x8xf32> to vector<16x8xf32>
    %79 = vector.extract_strided_slice %76 {offsets = [2, 0, 0], sizes = [2, 8, 8], strides = [1, 1, 1]} : vector<8x8x8xf32> to vector<2x8x8xf32>
    %80 = vector.shape_cast %79 : vector<2x8x8xf32> to vector<16x8xf32>
    %81 = vector.extract_strided_slice %76 {offsets = [4, 0, 0], sizes = [2, 8, 8], strides = [1, 1, 1]} : vector<8x8x8xf32> to vector<2x8x8xf32>
    %82 = vector.shape_cast %81 : vector<2x8x8xf32> to vector<16x8xf32>
    %83 = vector.extract_strided_slice %76 {offsets = [6, 0, 0], sizes = [2, 8, 8], strides = [1, 1, 1]} : vector<8x8x8xf32> to vector<2x8x8xf32>
    %84 = vector.shape_cast %83 : vector<2x8x8xf32> to vector<16x8xf32>
    %85 = tpu.concatenate %78, %80, %82, %84 in 1 : vector<16x8xf32>, vector<16x8xf32>, vector<16x8xf32>, vector<16x8xf32> -> vector<16x32xf32>
    %86 = arith.truncf %85 : vector<16x32xf32> to vector<16x32xbf16>
    %c0_17 = arith.constant 0 : index
    %c0_18 = arith.constant 0 : index
    %87 = vector.load %arg3[%c0_17, %c0_18] : memref<32x32xbf16, #tpu.memory_space<vmem>>, vector<32x32xbf16>
    %cst_19 = arith.constant dense<0.000000e+00> : vector<16x32xf32>
    %88 = tpu.matmul %86, %87, %cst_19 {dimension_numbers = #tpu.dot_dimension_numbers<[1], [0], [0], [1], [0, 0, 1, 1], [], []>} : vector<16x32xbf16>, vector<32x32xbf16>, vector<16x32xf32> -> vector<16x32xf32>
    %89 = vector.broadcast %6 : vector<1x32xf32> to vector<16x32xf32>
    %90 = arith.addf %88, %89 : vector<16x32xf32>
    %91 = arith.addf %0, %90 : vector<16x32xf32>
    %cst_20 = arith.constant dense<0.000000e+00> : vector<16xf32>
    %92 = vector.multi_reduction <add>, %91, %cst_20 [1] : vector<16x32xf32> to vector<16xf32>
    %93 = vector.shape_cast %92 : vector<16xf32> to vector<16x1xf32>
    %cst_21 = arith.constant 3.200000e+01 : f32
    %94 = vector.broadcast %cst_21 : f32 to vector<16x1xf32>
    %95 = arith.divf %93, %94 : vector<16x1xf32>
    %96 = vector.broadcast %95 : vector<16x1xf32> to vector<16x32xf32>
    %97 = arith.subf %91, %96 : vector<16x32xf32>
    %98 = arith.mulf %97, %97 : vector<16x32xf32>
    %cst_22 = arith.constant dense<0.000000e+00> : vector<16xf32>
    %99 = vector.multi_reduction <add>, %98, %cst_22 [1] : vector<16x32xf32> to vector<16xf32>
    %100 = vector.shape_cast %99 : vector<16xf32> to vector<16x1xf32>
    %cst_23 = arith.constant 3.200000e+01 : f32
    %101 = vector.broadcast %cst_23 : f32 to vector<16x1xf32>
    %102 = arith.divf %100, %101 : vector<16x1xf32>
    %103 = vector.broadcast %95 : vector<16x1xf32> to vector<16x32xf32>
    %104 = arith.subf %91, %103 : vector<16x32xf32>
    %cst_24 = arith.constant 9.99999974E-6 : f32
    %105 = vector.broadcast %cst_24 : f32 to vector<16x1xf32>
    %106 = arith.addf %102, %105 : vector<16x1xf32>
    %107 = math.rsqrt %106 : vector<16x1xf32>
    %108 = vector.broadcast %107 : vector<16x1xf32> to vector<16x32xf32>
    %109 = arith.mulf %104, %108 : vector<16x32xf32>
    %110 = vector.broadcast %4 : vector<1x32xf32> to vector<16x32xf32>
    %111 = arith.mulf %109, %110 : vector<16x32xf32>
    %112 = vector.broadcast %5 : vector<1x32xf32> to vector<16x32xf32>
    %113 = arith.addf %111, %112 : vector<16x32xf32>
    %114 = arith.truncf %113 : vector<16x32xf32> to vector<16x32xbf16>
    %c0_25 = arith.constant 0 : index
    %c0_26 = arith.constant 0 : index
    %115 = vector.load %arg4[%c0_25, %c0_26] : memref<32x128xbf16, #tpu.memory_space<vmem>>, vector<32x128xbf16>
    %cst_27 = arith.constant dense<0.000000e+00> : vector<16x128xf32>
    %116 = tpu.matmul %114, %115, %cst_27 {dimension_numbers = #tpu.dot_dimension_numbers<[1], [0], [0], [1], [0, 0, 1, 1], [], []>} : vector<16x32xbf16>, vector<32x128xbf16>, vector<16x128xf32> -> vector<16x128xf32>
    %c0_28 = arith.constant 0 : index
    %c0_29 = arith.constant 0 : index
    %117 = vector.load %arg5[%c0_28, %c0_29] : memref<1x128xf32, #tpu.memory_space<vmem>>, vector<1x128xf32>
    %118 = vector.broadcast %117 : vector<1x128xf32> to vector<16x128xf32>
    %119 = arith.addf %116, %118 : vector<16x128xf32>
    %cst_30 = arith.constant 5.000000e-01 : f32
    %120 = vector.broadcast %cst_30 : f32 to vector<16x128xf32>
    %121 = arith.mulf %120, %119 : vector<16x128xf32>
    %cst_31 = arith.constant 4.471500e-02 : f32
    %122 = vector.broadcast %cst_31 : f32 to vector<16x128xf32>
    %123 = arith.mulf %122, %119 : vector<16x128xf32>
    %124 = arith.mulf %123, %119 : vector<16x128xf32>
    %125 = arith.mulf %124, %119 : vector<16x128xf32>
    %126 = arith.addf %119, %125 : vector<16x128xf32>
    %cst_32 = arith.constant 0.797884583 : f32
    %127 = vector.broadcast %cst_32 : f32 to vector<16x128xf32>
    %128 = arith.mulf %127, %126 : vector<16x128xf32>
    %129 = math.tanh %128 : vector<16x128xf32>
    %cst_33 = arith.constant 1.000000e+00 : f32
    %130 = vector.broadcast %cst_33 : f32 to vector<16x128xf32>
    %131 = arith.addf %130, %129 : vector<16x128xf32>
    %132 = arith.mulf %121, %131 : vector<16x128xf32>
    %133 = arith.truncf %132 : vector<16x128xf32> to vector<16x128xbf16>
    %c0_34 = arith.constant 0 : index
    %c0_35 = arith.constant 0 : index
    %134 = vector.load %arg6[%c0_34, %c0_35] : memref<128x32xbf16, #tpu.memory_space<vmem>>, vector<128x32xbf16>
    %cst_36 = arith.constant dense<0.000000e+00> : vector<16x32xf32>
    %135 = tpu.matmul %133, %134, %cst_36 {dimension_numbers = #tpu.dot_dimension_numbers<[1], [0], [0], [1], [0, 0, 1, 1], [], []>} : vector<16x128xbf16>, vector<128x32xbf16>, vector<16x32xf32> -> vector<16x32xf32>
    %136 = vector.broadcast %7 : vector<1x32xf32> to vector<16x32xf32>
    %137 = arith.addf %135, %136 : vector<16x32xf32>
    %138 = arith.addf %91, %137 : vector<16x32xf32>
    %c0_37 = arith.constant 0 : index
    %c0_38 = arith.constant 0 : index
    %139 = vector.load %arg8[%c0_37, %c0_38] : memref<16x32xf32, #tpu.memory_space<vmem>>, vector<16x32xf32>
    tpu.vector_store %arg8[%c0_37, %c0_38], %138 {strides = array<i32>} : memref<16x32xf32, #tpu.memory_space<vmem>>, vector<16x32xf32>,
    return
  }
}

</mosaic_0001>

<llo_original>
// kernel: _transformer_block_impl.1
$region0: #{_transformer_block_impl.1}
  #allocation0 [shape = 'u32[]', space=smem, size = 0x4, offset = 0x4, fixed_abs, tag = 'smem constant byte address 0x4 - core index']
  #allocation1 [shape = 'u32[144,128]{1,0:T(1,128)}', space=vmem, size = 0x12000, scoped, tag = 'internal scratch']
  %s0 = inlined_call_operand.vmem [shape: f32[16,32], index: 0, kind: input, shape index: {}, may-alias: {0,8}]
  %s1 = inlined_call_operand.vmem [shape: bf16[32,96], index: 1, kind: input, shape index: {}]
  %s2 = inlined_call_operand.vmem [shape: f32[1,96], index: 2, kind: input, shape index: {}]
  %s3 = inlined_call_operand.vmem [shape: bf16[32,32], index: 3, kind: input, shape index: {}]
  %s4 = inlined_call_operand.vmem [shape: bf16[32,128], index: 4, kind: input, shape index: {}]
  %s5 = inlined_call_operand.vmem [shape: f32[1,128], index: 5, kind: input, shape index: {}]
  %s6 = inlined_call_operand.vmem [shape: bf16[128,32], index: 6, kind: input, shape index: {}]
  %s7 = inlined_call_operand.vmem [shape: f32[6,32], index: 7, kind: input, shape index: {}]
  %s8 = inlined_call_operand.vmem [shape: f32[16,32], index: 8, kind: output, shape index: {}, may-alias: {0,8}]
  %s9 = sld [smem:[#allocation0]]
  $region42: #{_transformer_block_impl.1} parent=0
    _
  %s11 = ssub.s32 1, %s9
  %s12 = scalar_select 0, %s11, %s9
  // Predicated region
  $region2: #{_transformer_block_impl.1} parent=0 // pred_check
    _
  $region3: #{_transformer_block_impl.1} parent=0 // pred_check_branch
    %14 = sbr.rel (0) target = $region5
  $region4: #{_transformer_block_impl.1} parent=0 // pred_region
    _
  $region5: #{_transformer_block_impl.1} parent=0 // pred_fallthru
    _
  // Predicated region
  $region6: #{_transformer_block_impl.1} parent=0 // pred_check
    _
  $region7: #{_transformer_block_impl.1} parent=0 // pred_check_branch
    %16 = sbr.rel (0) target = $region9
  $region8: #{_transformer_block_impl.1} parent=0 // pred_region
    _
  $region9: #{_transformer_block_impl.1} parent=0 // pred_fallthru
    _
  // Predicated region
  $region10: #{_transformer_block_impl.1} parent=0 // pred_check
    _
  $region11: #{_transformer_block_impl.1} parent=0 // pred_check_branch
    %18 = sbr.rel (0) target = $region13
  $region12: #{_transformer_block_impl.1} parent=0 // pred_region
    _
  $region13: #{_transformer_block_impl.1} parent=0 // pred_fallthru
    _
  // Predicated region
  $region14: #{_transformer_block_impl.1} parent=0 // pred_check
    _
  $region15: #{_transformer_block_impl.1} parent=0 // pred_check_branch
    %20 = sbr.rel (0) target = $region17
  $region16: #{_transformer_block_impl.1} parent=0 // pred_region
    _
  $region17: #{_transformer_block_impl.1} parent=0 // pred_fallthru
    _
  // Predicated region
  $region18: #{_transformer_block_impl.1} parent=0 // pred_check
    _
  $region19: #{_transformer_block_impl.1} parent=0 // pred_check_branch
    %22 = sbr.rel (0) target = $region21
  $region20: #{_transformer_block_impl.1} parent=0 // pred_region
    _
  $region21: #{_transformer_block_impl.1} parent=0 // pred_fallthru
    _
  // Predicated region
  $region22: #{_transformer_block_impl.1} parent=0 // pred_check
    _
  $region23: #{_transformer_block_impl.1} parent=0 // pred_check_branch
    %24 = sbr.rel (0) target = $region25
  $region24: #{_transformer_block_impl.1} parent=0 // pred_region
    _
  $region25: #{_transformer_block_impl.1} parent=0 // pred_fallthru
    _
  // Predicated region
  $region26: #{_transformer_block_impl.1} parent=0 // pred_check
    _
  $region27: #{_transformer_block_impl.1} parent=0 // pred_check_branch
    %26 = sbr.rel (0) target = $region29
  $region28: #{_transformer_block_impl.1} parent=0 // pred_region
    _
  $region29: #{_transformer_block_impl.1} parent=0 // pred_fallthru
    _
  // Predicated region
  $region30: #{_transformer_block_impl.1} parent=0 // pred_check
    _
  $region31: #{_transformer_block_impl.1} parent=0 // pred_check_branch
    %28 = sbr.rel (0) target = $region33
  $region32: #{_transformer_block_impl.1} parent=0 // pred_region
    _
  $region33: #{_transformer_block_impl.1} parent=0 // pred_fallthru
    _
  %v30 = vld [vmem:[%s0] sm:$0xff]
  %v31 = vld [vmem:[%s0 + $0x8] sm:$0xff]
  %v32 = vld [vmem:[%s7] sm:$0x3f]
  %vm33 = vcmask 261120
  %v34 = vsel %vm33, %v30, 0.0
  %35 = vadd.xlane.f32.xlu0 %v34
  %v36 = vpop.xlane.xlu0 %35
  %v37 = vsel %vm33, %v31, 0.0
  %38 = vadd.xlane.f32.xlu0 %v37
  %v39 = vpop.xlane.xlu0 %38
  %v40 = vrcp.pop 32.0
  %v41 = vmul.f32 %v36, %v40
  %v42 = vmul.f32 %v39, %v40
  %v43 = vsub.f32 %v30, %v41
  %v44 = vsub.f32 %v31, %v42
  %v45 = vmul.f32 %v43, %v43
  %v46 = vmul.f32 %v44, %v44
  %v47 = vsel %vm33, %v45, 0.0
  %48 = vadd.xlane.f32.xlu0 %v47
  %v49 = vpop.xlane.xlu0 %48
  %v50 = vsel %vm33, %v46, 0.0
  %51 = vadd.xlane.f32.xlu0 %v50
  %v52 = vpop.xlane.xlu0 %51
  %v53 = vmul.f32 %v49, %v40
  %v54 = vmul.f32 %v52, %v40
  %v55 = vadd.f32 %v53, 1e-05
  %v56 = vadd.f32 %v54, 1e-05
  %v57 = vrsqrt.pop %v55
  %v58 = vrsqrt.pop %v56
  %v59 = vmul.f32 %v43, %v57
  %v60 = vmul.f32 %v44, %v58
  %v61 = vlaneseq
  %v62 = vshrl.u32 %v61, 7
  %v63 = vsub.s32 0, %v62
  %v64 = vrot.slane %v32, %v63
  %v65 = vmul.f32 %v59, %v64
  %v66 = vmul.f32 %v60, %v64
  %v67 = vlaneseq
  %v68 = vshrl.u32 %v67, 7
  %v69 = vsub.s32 1, %v68
  %v70 = vrot.slane %v32, %v69
  %v71 = vadd.f32 %v65, %v70
  %v72 = vadd.f32 %v66, %v70
  %v73 = vpack.c.bf16 %v72, %v71
  %v74 = vld [vmem:[%s1] sm:$0xf]
  %v75 = vld [vmem:[%s1 + $0x4] sm:$0xf]
  %v76 = vld [vmem:[%s1 + $0x8] sm:$0xf]
  %v77 = vld [vmem:[%s1 + $0xc] sm:$0xf]
  %v78 = vld [vmem:[%s2] sm:$0x1]
  %v80 = vlaneseq
  %v81 = vshrl.u32 %v80, 7
  %v82 = vsub.s32 0, %v81
  %v83 = vrot.slane %v78, %v82
  %v89 = vunpack.c.l.b16 %v74
  %v90 = vunpack.c.l.b16 %v75
  %v91 = vunpack.c.l.b16 %v76
  %v92 = vunpack.c.l.b16 %v77
  %v93 = vpack.c.b16 %v90, %v89
  %v94 = vpack.c.b16 %v92, %v91
  %v98 = vsel %vm33, %v73, 0
  %100 = vmatprep.subr.bf16.mxu0 0
  %101 = vmatpush1.bf16.msra.mxu0 %v93
  %102 = vmatprep.subr.bf16.mxu0 0
  %103 = vmatpush1.bf16.msra.mxu0 %v94
  %104 = vmatprep.subr.bf16.mxu0 0
  %105 = vmatpush1.bf16.msra.mxu0 0
  %106 = vmatprep.subr.bf16.mxu0 0
  %107 = vmatpush1.bf16.msra.mxu0 0
  %108 = vmatprep.subr.bf16.mxu0 0
  %109 = vmatpush1.bf16.msra.mxu0 0
  %110 = vmatprep.subr.bf16.mxu0 0
  %111 = vmatpush1.bf16.msra.mxu0 0
  %112 = vmatprep.subr.bf16.mxu0 0
  %113 = vmatpush1.bf16.msra.mxu0 0
  %114 = vmatprep.subr.bf16.mxu0 0
  %115 = vmatpush1.bf16.msra.mxu0 0
  %116 = vmatprep.subr.bf16.mxu0 0
  %117 = vmatpush1.bf16.msra.mxu0 0
  %118 = vmatprep.subr.bf16.mxu0 0
  %119 = vmatpush1.bf16.msra.mxu0 0
  %120 = vmatprep.subr.bf16.mxu0 0
  %121 = vmatpush1.bf16.msra.mxu0 0
  %122 = vmatprep.subr.bf16.mxu0 0
  %123 = vmatpush1.bf16.msra.mxu0 0
  %124 = vmatprep.subr.bf16.mxu0 0
  %125 = vmatpush1.bf16.msra.mxu0 0
  %126 = vmatprep.subr.bf16.mxu0 0
  %127 = vmatpush1.bf16.msra.mxu0 0
  %128 = vmatprep.subr.bf16.mxu0 0
  %129 = vmatpush1.bf16.msra.mxu0 0
  %130 = vmatprep.subr.bf16.mxu0 0
  %131 = vmatpush1.bf16.msra.mxu0 0
  %132 = vmatprep.mubr.bf16.mxu0 0
  %133 = vmatmul.mubr.bf16.gmra.mrb[0].mxu0 %v98
  %v134 = vpop.f32.mrb[0].mxu0
  %v135 = vadd.f32 %v83, %v134
  %v136 = vpop.f32.mrb[0].mxu0
  %v137 = vpop.f32.mrb[0].mxu0
  %v138 = vadd.f32 %v83, %v137
  %v139 = vpop.f32.mrb[0].mxu0
  %140 = vdwg.mxu0
  %143 = vrot.lane.b32.xlu0 %v135, 120
  %v144 = vpop.permute.xlu0 %143
  %145 = vrot.lane.b32.xlu0 %v138, 120
  %v146 = vpop.permute.xlu0 %145
  %147 = vrot.lane.b32.xlu0 %v135, 112
  %v148 = vpop.permute.xlu0 %147
  %149 = vrot.lane.b32.xlu0 %v138, 112
  %v150 = vpop.permute.xlu0 %149
  %151 = vrot.lane.b32.xlu0 %v135, 104
  %v152 = vpop.permute.xlu0 %151
  %153 = vrot.lane.b32.xlu0 %v138, 104
  %v154 = vpop.permute.xlu0 %153
  %155 = vrot.lane.b32.xlu0 %v135, 96
  %v156 = vpop.permute.xlu0 %155
  %vm157 = vcmask 64512
  %v158 = vsel %vm157, %v135, 0
  %v160 = vsel %vm157, %v156, 0
  %162 = vmatprep.subr.mxu0 0.0
  %163 = vmatpush1.xpose.msra.mxu0 %v160
  %164 = vmatprep.subr.mxu0 0.0
  %165 = vmatpush1.xpose.msra.mxu0 0.0
  %166 = vmatprep.subr.mxu0 0.0
  %167 = vmatpush1.xpose.msra.mxu0 0.0
  %168 = vmatprep.subr.mxu0 0.0
  %169 = vmatpush1.xpose.msra.mxu0 0.0
  %170 = vmatprep.subr.mxu0 0.0
  %171 = vmatpush1.xpose.msra.mxu0 0.0
  %172 = vmatprep.subr.mxu0 0.0
  %173 = vmatpush1.xpose.msra.mxu0 0.0
  %174 = vmatprep.subr.mxu0 0.0
  %175 = vmatpush1.xpose.msra.mxu0 0.0
  %176 = vmatprep.subr.mxu0 0.0
  %177 = vmatpush1.xpose.msra.mxu0 0.0
  %178 = vmatprep.subr.mxu0 0.0
  %179 = vmatpush1.xpose.msra.mxu0 0.0
  %180 = vmatprep.subr.mxu0 0.0
  %181 = vmatpush1.xpose.msra.mxu0 0.0
  %182 = vmatprep.subr.mxu0 0.0
  %183 = vmatpush1.xpose.msra.mxu0 0.0
  %184 = vmatprep.subr.mxu0 0.0
  %185 = vmatpush1.xpose.msra.mxu0 0.0
  %186 = vmatprep.subr.mxu0 0.0
  %187 = vmatpush1.xpose.msra.mxu0 0.0
  %188 = vmatprep.subr.mxu0 0.0
  %189 = vmatpush1.xpose.msra.mxu0 0.0
  %190 = vmatprep.subr.mxu0 0.0
  %191 = vmatpush1.xpose.msra.mxu0 0.0
  %192 = vmatprep.subr.mxu0 0.0
  %193 = vmatpush1.xpose.msra.mxu0 0.0
  %194 = vmatprep.subr.mxu0 0.0
  %195 = vmatpush1.xpose.msra.mxu0 0.0
  %196 = vmatprep.subr.mxu0 0.0
  %197 = vmatpush1.xpose.msra.mxu0 0.0
  %198 = vmatprep.subr.mxu0 0.0
  %199 = vmatpush1.xpose.msra.mxu0 0.0
  %200 = vmatprep.subr.mxu0 0.0
  %201 = vmatpush1.xpose.msra.mxu0 0.0
  %202 = vmatprep.subr.mxu0 0.0
  %203 = vmatpush1.xpose.msra.mxu0 0.0
  %204 = vmatprep.subr.mxu0 0.0
  %205 = vmatpush1.xpose.msra.mxu0 0.0
  %206 = vmatprep.subr.mxu0 0.0
  %207 = vmatpush1.xpose.msra.mxu0 0.0
  %208 = vmatprep.subr.mxu0 0.0
  %209 = vmatpush1.xpose.msra.mxu0 0.0
  %210 = vmatprep.subr.mxu0 0.0
  %211 = vmatpush1.xpose.msra.mxu0 0.0
  %212 = vmatprep.subr.mxu0 0.0
  %213 = vmatpush1.xpose.msra.mxu0 0.0
  %214 = vmatprep.subr.mxu0 0.0
  %215 = vmatpush1.xpose.msra.mxu0 0.0
  %216 = vmatprep.subr.mxu0 0.0
  %217 = vmatpush1.xpose.msra.mxu0 0.0
  %218 = vmatprep.subr.mxu0 0.0
  %219 = vmatpush1.xpose.msra.mxu0 0.0
  %220 = vmatprep.subr.mxu0 0.0
  %221 = vmatpush1.xpose.msra.mxu0 0.0
  %222 = vmatprep.subr.mxu0 0.0
  %223 = vmatpush1.xpose.msra.mxu0 0.0
  %224 = vmatprep.subr.mxu0 0.0
  %225 = vmatpush1.xpose.msra.mxu0 0.0
  %226 = vmatprep.mubr.f32.mxu0 0.0
  %227 = vmatmul.mubr.f32.gmra.mrb[0].mxu0 %v158
  %v228 = vpop.f32.mrb[0].mxu0
  %v229 = vadd.f32 0.0, %v228
  %v230 = vpop.f32.mrb[0].mxu0
  %231 = vdwg.mxu0
  %232 = vrot.lane.b32.xlu0 %v138, 96
  %v233 = vpop.permute.xlu0 %232
  %v234 = vsel %vm157, %v138, 0
  %v236 = vsel %vm157, %v233, 0
  %238 = vmatprep.subr.mxu0 0.0
  %239 = vmatpush1.xpose.msra.mxu0 %v236
  %240 = vmatprep.subr.mxu0 0.0
  %241 = vmatpush1.xpose.msra.mxu0 0.0
  %242 = vmatprep.subr.mxu0 0.0
  %243 = vmatpush1.xpose.msra.mxu0 0.0
  %244 = vmatprep.subr.mxu0 0.0
  %245 = vmatpush1.xpose.msra.mxu0 0.0
  %246 = vmatprep.subr.mxu0 0.0
  %247 = vmatpush1.xpose.msra.mxu0 0.0
  %248 = vmatprep.subr.mxu0 0.0
  %249 = vmatpush1.xpose.msra.mxu0 0.0
  %250 = vmatprep.subr.mxu0 0.0
  %251 = vmatpush1.xpose.msra.mxu0 0.0
  %252 = vmatprep.subr.mxu0 0.0
  %253 = vmatpush1.xpose.msra.mxu0 0.0
  %254 = vmatprep.subr.mxu0 0.0
  %255 = vmatpush1.xpose.msra.mxu0 0.0
  %256 = vmatprep.subr.mxu0 0.0
  %257 = vmatpush1.xpose.msra.mxu0 0.0
  %258 = vmatprep.subr.mxu0 0.0
  %259 = vmatpush1.xpose.msra.mxu0 0.0
  %260 = vmatprep.subr.mxu0 0.0
  %261 = vmatpush1.xpose.msra.mxu0 0.0
  %262 = vmatprep.subr.mxu0 0.0
  %263 = vmatpush1.xpose.msra.mxu0 0.0
  %264 = vmatprep.subr.mxu0 0.0
  %265 = vmatpush1.xpose.msra.mxu0 0.0
  %266 = vmatprep.subr.mxu0 0.0
  %267 = vmatpush1.xpose.msra.mxu0 0.0
  %268 = vmatprep.subr.mxu0 0.0
  %269 = vmatpush1.xpose.msra.mxu0 0.0
  %270 = vmatprep.subr.mxu0 0.0
  %271 = vmatpush1.xpose.msra.mxu0 0.0
  %272 = vmatprep.subr.mxu0 0.0
  %273 = vmatpush1.xpose.msra.mxu0 0.0
  %274 = vmatprep.subr.mxu0 0.0
  %275 = vmatpush1.xpose.msra.mxu0 0.0
  %276 = vmatprep.subr.mxu0 0.0
  %277 = vmatpush1.xpose.msra.mxu0 0.0
  %278 = vmatprep.subr.mxu0 0.0
  %279 = vmatpush1.xpose.msra.mxu0 0.0
  %280 = vmatprep.subr.mxu0 0.0
  %281 = vmatpush1.xpose.msra.mxu0 0.0
  %282 = vmatprep.subr.mxu0 0.0
  %283 = vmatpush1.xpose.msra.mxu0 0.0
  %284 = vmatprep.subr.mxu0 0.0
  %285 = vmatpush1.xpose.msra.mxu0 0.0
  %286 = vmatprep.subr.mxu0 0.0
  %287 = vmatpush1.xpose.msra.mxu0 0.0
  %288 = vmatprep.subr.mxu0 0.0
  %289 = vmatpush1.xpose.msra.mxu0 0.0
  %290 = vmatprep.subr.mxu0 0.0
  %291 = vmatpush1.xpose.msra.mxu0 0.0
  %292 = vmatprep.subr.mxu0 0.0
  %293 = vmatpush1.xpose.msra.mxu0 0.0
  %294 = vmatprep.subr.mxu0 0.0
  %295 = vmatpush1.xpose.msra.mxu0 0.0
  %296 = vmatprep.subr.mxu0 0.0
  %297 = vmatpush1.xpose.msra.mxu0 0.0
  %298 = vmatprep.subr.mxu0 0.0
  %299 = vmatpush1.xpose.msra.mxu0 0.0
  %300 = vmatprep.subr.mxu0 0.0
  %301 = vmatpush1.xpose.msra.mxu0 0.0
  %302 = vmatprep.mubr.f32.mxu0 0.0
  %303 = vmatmul.mubr.f32.gmra.mrb[0].mxu0 %v234
  %v304 = vpop.f32.mrb[0].mxu0
  %v305 = vadd.f32 0.0, %v304
  %v306 = vpop.f32.mrb[0].mxu0
  %307 = vdwg.mxu0
  %308 = vrot.lane.b32.xlu0 %v144, 96
  %v309 = vpop.permute.xlu0 %308
  %v310 = vsel %vm157, %v144, 0
  %v312 = vsel %vm157, %v309, 0
  %314 = vmatprep.subr.mxu0 0.0
  %315 = vmatpush1.xpose.msra.mxu0 %v312
  %316 = vmatprep.subr.mxu0 0.0
  %317 = vmatpush1.xpose.msra.mxu0 0.0
  %318 = vmatprep.subr.mxu0 0.0
  %319 = vmatpush1.xpose.msra.mxu0 0.0
  %320 = vmatprep.subr.mxu0 0.0
  %321 = vmatpush1.xpose.msra.mxu0 0.0
  %322 = vmatprep.subr.mxu0 0.0
  %323 = vmatpush1.xpose.msra.mxu0 0.0
  %324 = vmatprep.subr.mxu0 0.0
  %325 = vmatpush1.xpose.msra.mxu0 0.0
  %326 = vmatprep.subr.mxu0 0.0
  %327 = vmatpush1.xpose.msra.mxu0 0.0
  %328 = vmatprep.subr.mxu0 0.0
  %329 = vmatpush1.xpose.msra.mxu0 0.0
  %330 = vmatprep.subr.mxu0 0.0
  %331 = vmatpush1.xpose.msra.mxu0 0.0
  %332 = vmatprep.subr.mxu0 0.0
  %333 = vmatpush1.xpose.msra.mxu0 0.0
  %334 = vmatprep.subr.mxu0 0.0
  %335 = vmatpush1.xpose.msra.mxu0 0.0
  %336 = vmatprep.subr.mxu0 0.0
  %337 = vmatpush1.xpose.msra.mxu0 0.0
  %338 = vmatprep.subr.mxu0 0.0
  %339 = vmatpush1.xpose.msra.mxu0 0.0
  %340 = vmatprep.subr.mxu0 0.0
  %341 = vmatpush1.xpose.msra.mxu0 0.0
  %342 = vmatprep.subr.mxu0 0.0
  %343 = vmatpush1.xpose.msra.mxu0 0.0
  %344 = vmatprep.subr.mxu0 0.0
  %345 = vmatpush1.xpose.msra.mxu0 0.0
  %346 = vmatprep.subr.mxu0 0.0
  %347 = vmatpush1.xpose.msra.mxu0 0.0
  %348 = vmatprep.subr.mxu0 0.0
  %349 = vmatpush1.xpose.msra.mxu0 0.0
  %350 = vmatprep.subr.mxu0 0.0
  %351 = vmatpush1.xpose.msra.mxu0 0.0
  %352 = vmatprep.subr.mxu0 0.0
  %353 = vmatpush1.xpose.msra.mxu0 0.0
  %354 = vmatprep.subr.mxu0 0.0
  %355 = vmatpush1.xpose.msra.mxu0 0.0
  %356 = vmatprep.subr.mxu0 0.0
  %357 = vmatpush1.xpose.msra.mxu0 0.0
  %358 = vmatprep.subr.mxu0 0.0
  %359 = vmatpush1.xpose.msra.mxu0 0.0
  %360 = vmatprep.subr.mxu0 0.0
  %361 = vmatpush1.xpose.msra.mxu0 0.0
  %362 = vmatprep.subr.mxu0 0.0
  %363 = vmatpush1.xpose.msra.mxu0 0.0
  %364 = vmatprep.subr.mxu0 0.0
  %365 = vmatpush1.xpose.msra.mxu0 0.0
  %366 = vmatprep.subr.mxu0 0.0
  %367 = vmatpush1.xpose.msra.mxu0 0.0
  %368 = vmatprep.subr.mxu0 0.0
  %369 = vmatpush1.xpose.msra.mxu0 0.0
  %370 = vmatprep.subr.mxu0 0.0
  %371 = vmatpush1.xpose.msra.mxu0 0.0
  %372 = vmatprep.subr.mxu0 0.0
  %373 = vmatpush1.xpose.msra.mxu0 0.0
  %374 = vmatprep.subr.mxu0 0.0
  %375 = vmatpush1.xpose.msra.mxu0 0.0
  %376 = vmatprep.subr.mxu0 0.0
  %377 = vmatpush1.xpose.msra.mxu0 0.0
  %378 = vmatprep.mubr.f32.mxu0 0.0
  %379 = vmatmul.mubr.f32.gmra.mrb[0].mxu0 %v310
  %v380 = vpop.f32.mrb[0].mxu0
  %v381 = vadd.f32 0.0, %v380
  %v382 = vpop.f32.mrb[0].mxu0
  %383 = vdwg.mxu0
  %384 = vrot.lane.b32.xlu0 %v146, 96
  %v385 = vpop.permute.xlu0 %384
  %v386 = vsel %vm157, %v146, 0
  %v388 = vsel %vm157, %v385, 0
  %390 = vmatprep.subr.mxu0 0.0
  %391 = vmatpush1.xpose.msra.mxu0 %v388
  %392 = vmatprep.subr.mxu0 0.0
  %393 = vmatpush1.xpose.msra.mxu0 0.0
  %394 = vmatprep.subr.mxu0 0.0
  %395 = vmatpush1.xpose.msra.mxu0 0.0
  %396 = vmatprep.subr.mxu0 0.0
  %397 = vmatpush1.xpose.msra.mxu0 0.0
  %398 = vmatprep.subr.mxu0 0.0
  %399 = vmatpush1.xpose.msra.mxu0 0.0
  %400 = vmatprep.subr.mxu0 0.0
  %401 = vmatpush1.xpose.msra.mxu0 0.0
  %402 = vmatprep.subr.mxu0 0.0
  %403 = vmatpush1.xpose.msra.mxu0 0.0
  %404 = vmatprep.subr.mxu0 0.0
  %405 = vmatpush1.xpose.msra.mxu0 0.0
  %406 = vmatprep.subr.mxu0 0.0
  %407 = vmatpush1.xpose.msra.mxu0 0.0
  %408 = vmatprep.subr.mxu0 0.0
  %409 = vmatpush1.xpose.msra.mxu0 0.0
  %410 = vmatprep.subr.mxu0 0.0
  %411 = vmatpush1.xpose.msra.mxu0 0.0
  %412 = vmatprep.subr.mxu0 0.0
  %413 = vmatpush1.xpose.msra.mxu0 0.0
  %414 = vmatprep.subr.mxu0 0.0
  %415 = vmatpush1.xpose.msra.mxu0 0.0
  %416 = vmatprep.subr.mxu0 0.0
  %417 = vmatpush1.xpose.msra.mxu0 0.0
  %418 = vmatprep.subr.mxu0 0.0
  %419 = vmatpush1.xpose.msra.mxu0 0.0
  %420 = vmatprep.subr.mxu0 0.0
  %421 = vmatpush1.xpose.msra.mxu0 0.0
  %422 = vmatprep.subr.mxu0 0.0
  %423 = vmatpush1.xpose.msra.mxu0 0.0
  %424 = vmatprep.subr.mxu0 0.0
  %425 = vmatpush1.xpose.msra.mxu0 0.0
  %426 = vmatprep.subr.mxu0 0.0
  %427 = vmatpush1.xpose.msra.mxu0 0.0
  %428 = vmatprep.subr.mxu0 0.0
  %429 = vmatpush1.xpose.msra.mxu0 0.0
  %430 = vmatprep.subr.mxu0 0.0
  %431 = vmatpush1.xpose.msra.mxu0 0.0
  %432 = vmatprep.subr.mxu0 0.0
  %433 = vmatpush1.xpose.msra.mxu0 0.0
  %434 = vmatprep.subr.mxu0 0.0
  %435 = vmatpush1.xpose.msra.mxu0 0.0
  %436 = vmatprep.subr.mxu0 0.0
  %437 = vmatpush1.xpose.msra.mxu0 0.0
  %438 = vmatprep.subr.mxu0 0.0
  %439 = vmatpush1.xpose.msra.mxu0 0.0
  %440 = vmatprep.subr.mxu0 0.0
  %441 = vmatpush1.xpose.msra.mxu0 0.0
  %442 = vmatprep.subr.mxu0 0.0
  %443 = vmatpush1.xpose.msra.mxu0 0.0
  %444 = vmatprep.subr.mxu0 0.0
  %445 = vmatpush1.xpose.msra.mxu0 0.0
  %446 = vmatprep.subr.mxu0 0.0
  %447 = vmatpush1.xpose.msra.mxu0 0.0
  %448 = vmatprep.subr.mxu0 0.0
  %449 = vmatpush1.xpose.msra.mxu0 0.0
  %450 = vmatprep.subr.mxu0 0.0
  %451 = vmatpush1.xpose.msra.mxu0 0.0
  %452 = vmatprep.subr.mxu0 0.0
  %453 = vmatpush1.xpose.msra.mxu0 0.0
  %454 = vmatprep.mubr.f32.mxu0 0.0
  %455 = vmatmul.mubr.f32.gmra.mrb[0].mxu0 %v386
  %v456 = vpop.f32.mrb[0].mxu0
  %v457 = vadd.f32 0.0, %v456
  %v458 = vpop.f32.mrb[0].mxu0
  %459 = vdwg.mxu0
  %460 = vrot.lane.b32.xlu0 %v148, 96
  %v461 = vpop.permute.xlu0 %460
  %v462 = vsel %vm157, %v148, 0
  %v464 = vsel %vm157, %v461, 0
  %466 = vmatprep.subr.mxu0 0.0
  %467 = vmatpush1.xpose.msra.mxu0 %v464
  %468 = vmatprep.subr.mxu0 0.0
  %469 = vmatpush1.xpose.msra.mxu0 0.0
  %470 = vmatprep.subr.mxu0 0.0
  %471 = vmatpush1.xpose.msra.mxu0 0.0
  %472 = vmatprep.subr.mxu0 0.0
  %473 = vmatpush1.xpose.msra.mxu0 0.0
  %474 = vmatprep.subr.mxu0 0.0
  %475 = vmatpush1.xpose.msra.mxu0 0.0
  %476 = vmatprep.subr.mxu0 0.0
  %477 = vmatpush1.xpose.msra.mxu0 0.0
  %478 = vmatprep.subr.mxu0 0.0
  %479 = vmatpush1.xpose.msra.mxu0 0.0
  %480 = vmatprep.subr.mxu0 0.0
  %481 = vmatpush1.xpose.msra.mxu0 0.0
  %482 = vmatprep.subr.mxu0 0.0
  %483 = vmatpush1.xpose.msra.mxu0 0.0
  %484 = vmatprep.subr.mxu0 0.0
  %485 = vmatpush1.xpose.msra.mxu0 0.0
  %486 = vmatprep.subr.mxu0 0.0
  %487 = vmatpush1.xpose.msra.mxu0 0.0
  %488 = vmatprep.subr.mxu0 0.0
  %489 = vmatpush1.xpose.msra.mxu0 0.0
  %490 = vmatprep.subr.mxu0 0.0
  %491 = vmatpush1.xpose.msra.mxu0 0.0
  %492 = vmatprep.subr.mxu0 0.0
  %493 = vmatpush1.xpose.msra.mxu0 0.0
  %494 = vmatprep.subr.mxu0 0.0
  %495 = vmatpush1.xpose.msra.mxu0 0.0
  %496 = vmatprep.subr.mxu0 0.0
  %497 = vmatpush1.xpose.msra.mxu0 0.0
  %498 = vmatprep.subr.mxu0 0.0
  %499 = vmatpush1.xpose.msra.mxu0 0.0
  %500 = vmatprep.subr.mxu0 0.0
  %501 = vmatpush1.xpose.msra.mxu0 0.0
  %502 = vmatprep.subr.mxu0 0.0
  %503 = vmatpush1.xpose.msra.mxu0 0.0
  %504 = vmatprep.subr.mxu0 0.0
  %505 = vmatpush1.xpose.msra.mxu0 0.0
  %506 = vmatprep.subr.mxu0 0.0
  %507 = vmatpush1.xpose.msra.mxu0 0.0
  %508 = vmatprep.subr.mxu0 0.0
  %509 = vmatpush1.xpose.msra.mxu0 0.0
  %510 = vmatprep.subr.mxu0 0.0
  %511 = vmatpush1.xpose.msra.mxu0 0.0
  %512 = vmatprep.subr.mxu0 0.0
  %513 = vmatpush1.xpose.msra.mxu0 0.0
  %514 = vmatprep.subr.mxu0 0.0
  %515 = vmatpush1.xpose.msra.mxu0 0.0
  %516 = vmatprep.subr.mxu0 0.0
  %517 = vmatpush1.xpose.msra.mxu0 0.0
  %518 = vmatprep.subr.mxu0 0.0
  %519 = vmatpush1.xpose.msra.mxu0 0.0
  %520 = vmatprep.subr.mxu0 0.0
  %521 = vmatpush1.xpose.msra.mxu0 0.0
  %522 = vmatprep.subr.mxu0 0.0
  %523 = vmatpush1.xpose.msra.mxu0 0.0
  %524 = vmatprep.subr.mxu0 0.0
  %525 = vmatpush1.xpose.msra.mxu0 0.0
  %526 = vmatprep.subr.mxu0 0.0
  %527 = vmatpush1.xpose.msra.mxu0 0.0
  %528 = vmatprep.subr.mxu0 0.0
  %529 = vmatpush1.xpose.msra.mxu0 0.0
  %530 = vmatprep.mubr.f32.mxu0 0.0
  %531 = vmatmul.mubr.f32.gmra.mrb[0].mxu0 %v462
  %v532 = vpop.f32.mrb[0].mxu0
  %v533 = vadd.f32 0.0, %v532
  %v534 = vpop.f32.mrb[0].mxu0
  %535 = vdwg.mxu0
  %536 = vrot.lane.b32.xlu0 %v150, 96
  %v537 = vpop.permute.xlu0 %536
  %v538 = vsel %vm157, %v150, 0
  %v540 = vsel %vm157, %v537, 0
  %542 = vmatprep.subr.mxu0 0.0
  %543 = vmatpush1.xpose.msra.mxu0 %v540
  %544 = vmatprep.subr.mxu0 0.0
  %545 = vmatpush1.xpose.msra.mxu0 0.0
  %546 = vmatprep.subr.mxu0 0.0
  %547 = vmatpush1.xpose.msra.mxu0 0.0
  %548 = vmatprep.subr.mxu0 0.0
  %549 = vmatpush1.xpose.msra.mxu0 0.0
  %550 = vmatprep.subr.mxu0 0.0
  %551 = vmatpush1.xpose.msra.mxu0 0.0
  %552 = vmatprep.subr.mxu0 0.0
  %553 = vmatpush1.xpose.msra.mxu0 0.0
  %554 = vmatprep.subr.mxu0 0.0
  %555 = vmatpush1.xpose.msra.mxu0 0.0
  %556 = vmatprep.subr.mxu0 0.0
  %557 = vmatpush1.xpose.msra.mxu0 0.0
  %558 = vmatprep.subr.mxu0 0.0
  %559 = vmatpush1.xpose.msra.mxu0 0.0
  %560 = vmatprep.subr.mxu0 0.0
  %561 = vmatpush1.xpose.msra.mxu0 0.0
  %562 = vmatprep.subr.mxu0 0.0
  %563 = vmatpush1.xpose.msra.mxu0 0.0
  %564 = vmatprep.subr.mxu0 0.0
  %565 = vmatpush1.xpose.msra.mxu0 0.0
  %566 = vmatprep.subr.mxu0 0.0
  %567 = vmatpush1.xpose.msra.mxu0 0.0
  %568 = vmatprep.subr.mxu0 0.0
  %569 = vmatpush1.xpose.msra.mxu0 0.0
  %570 = vmatprep.subr.mxu0 0.0
  %571 = vmatpush1.xpose.msra.mxu0 0.0
  %572 = vmatprep.subr.mxu0 0.0
  %573 = vmatpush1.xpose.msra.mxu0 0.0
  %574 = vmatprep.subr.mxu0 0.0
  %575 = vmatpush1.xpose.msra.mxu0 0.0
  %576 = vmatprep.subr.mxu0 0.0
  %577 = vmatpush1.xpose.msra.mxu0 0.0
  %578 = vmatprep.subr.mxu0 0.0
  %579 = vmatpush1.xpose.msra.mxu0 0.0
  %580 = vmatprep.subr.mxu0 0.0
  %581 = vmatpush1.xpose.msra.mxu0 0.0
  %582 = vmatprep.subr.mxu0 0.0
  %583 = vmatpush1.xpose.msra.mxu0 0.0
  %584 = vmatprep.subr.mxu0 0.0
  %585 = vmatpush1.xpose.msra.mxu0 0.0
  %586 = vmatprep.subr.mxu0 0.0
  %587 = vmatpush1.xpose.msra.mxu0 0.0
  %588 = vmatprep.subr.mxu0 0.0
  %589 = vmatpush1.xpose.msra.mxu0 0.0
  %590 = vmatprep.subr.mxu0 0.0
  %591 = vmatpush1.xpose.msra.mxu0 0.0
  %592 = vmatprep.subr.mxu0 0.0
  %593 = vmatpush1.xpose.msra.mxu0 0.0
  %594 = vmatprep.subr.mxu0 0.0
  %595 = vmatpush1.xpose.msra.mxu0 0.0
  %596 = vmatprep.subr.mxu0 0.0
  %597 = vmatpush1.xpose.msra.mxu0 0.0
  %598 = vmatprep.subr.mxu0 0.0
  %599 = vmatpush1.xpose.msra.mxu0 0.0
  %600 = vmatprep.subr.mxu0 0.0
  %601 = vmatpush1.xpose.msra.mxu0 0.0
  %602 = vmatprep.subr.mxu0 0.0
  %603 = vmatpush1.xpose.msra.mxu0 0.0
  %604 = vmatprep.subr.mxu0 0.0
  %605 = vmatpush1.xpose.msra.mxu0 0.0
  %606 = vmatprep.mubr.f32.mxu0 0.0
  %607 = vmatmul.mubr.f32.gmra.mrb[0].mxu0 %v538
  %v608 = vpop.f32.mrb[0].mxu0
  %v609 = vadd.f32 0.0, %v608
  %v610 = vpop.f32.mrb[0].mxu0
  %611 = vdwg.mxu0
  %612 = vrot.lane.b32.xlu0 %v152, 96
  %v613 = vpop.permute.xlu0 %612
  %v614 = vsel %vm157, %v152, 0
  %v616 = vsel %vm157, %v613, 0
  %618 = vmatprep.subr.mxu0 0.0
  %619 = vmatpush1.xpose.msra.mxu0 %v616
  %620 = vmatprep.subr.mxu0 0.0
  %621 = vmatpush1.xpose.msra.mxu0 0.0
  %622 = vmatprep.subr.mxu0 0.0
  %623 = vmatpush1.xpose.msra.mxu0 0.0
  %624 = vmatprep.subr.mxu0 0.0
  %625 = vmatpush1.xpose.msra.mxu0 0.0
  %626 = vmatprep.subr.mxu0 0.0
  %627 = vmatpush1.xpose.msra.mxu0 0.0
  %628 = vmatprep.subr.mxu0 0.0
  %629 = vmatpush1.xpose.msra.mxu0 0.0
  %630 = vmatprep.subr.mxu0 0.0
  %631 = vmatpush1.xpose.msra.mxu0 0.0
  %632 = vmatprep.subr.mxu0 0.0
  %633 = vmatpush1.xpose.msra.mxu0 0.0
  %634 = vmatprep.subr.mxu0 0.0
  %635 = vmatpush1.xpose.msra.mxu0 0.0
  %636 = vmatprep.subr.mxu0 0.0
  %637 = vmatpush1.xpose.msra.mxu0 0.0
  %638 = vmatprep.subr.mxu0 0.0
  %639 = vmatpush1.xpose.msra.mxu0 0.0
  %640 = vmatprep.subr.mxu0 0.0
  %641 = vmatpush1.xpose.msra.mxu0 0.0
  %642 = vmatprep.subr.mxu0 0.0
  %643 = vmatpush1.xpose.msra.mxu0 0.0
  %644 = vmatprep.subr.mxu0 0.0
  %645 = vmatpush1.xpose.msra.mxu0 0.0
  %646 = vmatprep.subr.mxu0 0.0
  %647 = vmatpush1.xpose.msra.mxu0 0.0
  %648 = vmatprep.subr.mxu0 0.0
  %649 = vmatpush1.xpose.msra.mxu0 0.0
  %650 = vmatprep.subr.mxu0 0.0
  %651 = vmatpush1.xpose.msra.mxu0 0.0
  %652 = vmatprep.subr.mxu0 0.0
  %653 = vmatpush1.xpose.msra.mxu0 0.0
  %654 = vmatprep.subr.mxu0 0.0
  %655 = vmatpush1.xpose.msra.mxu0 0.0
  %656 = vmatprep.subr.mxu0 0.0
  %657 = vmatpush1.xpose.msra.mxu0 0.0
  %658 = vmatprep.subr.mxu0 0.0
  %659 = vmatpush1.xpose.msra.mxu0 0.0
  %660 = vmatprep.subr.mxu0 0.0
  %661 = vmatpush1.xpose.msra.mxu0 0.0
  %662 = vmatprep.subr.mxu0 0.0
  %663 = vmatpush1.xpose.msra.mxu0 0.0
  %664 = vmatprep.subr.mxu0 0.0
  %665 = vmatpush1.xpose.msra.mxu0 0.0
  %666 = vmatprep.subr.mxu0 0.0
  %667 = vmatpush1.xpose.msra.mxu0 0.0
  %668 = vmatprep.subr.mxu0 0.0
  %669 = vmatpush1.xpose.msra.mxu0 0.0
  %670 = vmatprep.subr.mxu0 0.0
  %671 = vmatpush1.xpose.msra.mxu0 0.0
  %672 = vmatprep.subr.mxu0 0.0
  %673 = vmatpush1.xpose.msra.mxu0 0.0
  %674 = vmatprep.subr.mxu0 0.0
  %675 = vmatpush1.xpose.msra.mxu0 0.0
  %676 = vmatprep.subr.mxu0 0.0
  %677 = vmatpush1.xpose.msra.mxu0 0.0
  %678 = vmatprep.subr.mxu0 0.0
  %679 = vmatpush1.xpose.msra.mxu0 0.0
  %680 = vmatprep.subr.mxu0 0.0
  %681 = vmatpush1.xpose.msra.mxu0 0.0
  %682 = vmatprep.mubr.f32.mxu0 0.0
  %683 = vmatmul.mubr.f32.gmra.mrb[0].mxu0 %v614
  %v684 = vpop.f32.mrb[0].mxu0
  %v685 = vadd.f32 0.0, %v684
  %v686 = vpop.f32.mrb[0].mxu0
  %687 = vdwg.mxu0
  %688 = vrot.lane.b32.xlu0 %v154, 96
  %v689 = vpop.permute.xlu0 %688
  %v690 = vsel %vm157, %v154, 0
  %v692 = vsel %vm157, %v689, 0
  %694 = vmatprep.subr.mxu0 0.0
  %695 = vmatpush1.xpose.msra.mxu0 %v692
  %696 = vmatprep.subr.mxu0 0.0
  %697 = vmatpush1.xpose.msra.mxu0 0.0
  %698 = vmatprep.subr.mxu0 0.0
  %699 = vmatpush1.xpose.msra.mxu0 0.0
  %700 = vmatprep.subr.mxu0 0.0
  %701 = vmatpush1.xpose.msra.mxu0 0.0
  %702 = vmatprep.subr.mxu0 0.0
  %703 = vmatpush1.xpose.msra.mxu0 0.0
  %704 = vmatprep.subr.mxu0 0.0
  %705 = vmatpush1.xpose.msra.mxu0 0.0
  %706 = vmatprep.subr.mxu0 0.0
  %707 = vmatpush1.xpose.msra.mxu0 0.0
  %708 = vmatprep.subr.mxu0 0.0
  %709 = vmatpush1.xpose.msra.mxu0 0.0
  %710 = vmatprep.subr.mxu0 0.0
  %711 = vmatpush1.xpose.msra.mxu0 0.0
  %712 = vmatprep.subr.mxu0 0.0
  %713 = vmatpush1.xpose.msra.mxu0 0.0
  %714 = vmatprep.subr.mxu0 0.0
  %715 = vmatpush1.xpose.msra.mxu0 0.0
  %716 = vmatprep.subr.mxu0 0.0
  %717 = vmatpush1.xpose.msra.mxu0 0.0
  %718 = vmatprep.subr.mxu0 0.0
  %719 = vmatpush1.xpose.msra.mxu0 0.0
  %720 = vmatprep.subr.mxu0 0.0
  %721 = vmatpush1.xpose.msra.mxu0 0.0
  %722 = vmatprep.subr.mxu0 0.0
  %723 = vmatpush1.xpose.msra.mxu0 0.0
  %724 = vmatprep.subr.mxu0 0.0
  %725 = vmatpush1.xpose.msra.mxu0 0.0
  %726 = vmatprep.subr.mxu0 0.0
  %727 = vmatpush1.xpose.msra.mxu0 0.0
  %728 = vmatprep.subr.mxu0 0.0
  %729 = vmatpush1.xpose.msra.mxu0 0.0
  %730 = vmatprep.subr.mxu0 0.0
  %731 = vmatpush1.xpose.msra.mxu0 0.0
  %732 = vmatprep.subr.mxu0 0.0
  %733 = vmatpush1.xpose.msra.mxu0 0.0
  %734 = vmatprep.subr.mxu0 0.0
  %735 = vmatpush1.xpose.msra.mxu0 0.0
  %736 = vmatprep.subr.mxu0 0.0
  %737 = vmatpush1.xpose.msra.mxu0 0.0
  %738 = vmatprep.subr.mxu0 0.0
  %739 = vmatpush1.xpose.msra.mxu0 0.0
  %740 = vmatprep.subr.mxu0 0.0
  %741 = vmatpush1.xpose.msra.mxu0 0.0
  %742 = vmatprep.subr.mxu0 0.0
  %743 = vmatpush1.xpose.msra.mxu0 0.0
  %744 = vmatprep.subr.mxu0 0.0
  %745 = vmatpush1.xpose.msra.mxu0 0.0
  %746 = vmatprep.subr.mxu0 0.0
  %747 = vmatpush1.xpose.msra.mxu0 0.0
  %748 = vmatprep.subr.mxu0 0.0
  %749 = vmatpush1.xpose.msra.mxu0 0.0
  %750 = vmatprep.subr.mxu0 0.0
  %751 = vmatpush1.xpose.msra.mxu0 0.0
  %752 = vmatprep.subr.mxu0 0.0
  %753 = vmatpush1.xpose.msra.mxu0 0.0
  %754 = vmatprep.subr.mxu0 0.0
  %755 = vmatpush1.xpose.msra.mxu0 0.0
  %756 = vmatprep.subr.mxu0 0.0
  %757 = vmatpush1.xpose.msra.mxu0 0.0
  %758 = vmatprep.mubr.f32.mxu0 0.0
  %759 = vmatmul.mubr.f32.gmra.mrb[0].mxu0 %v690
  %v760 = vpop.f32.mrb[0].mxu0
  %v761 = vadd.f32 0.0, %v760
  %v762 = vpop.f32.mrb[0].mxu0
  %763 = vdwg.mxu0
  %v764 = vmul.f32 %v229, 0.35355338
  %v765 = vmul.f32 %v305, 0.35355338
  %v766 = vmul.f32 %v381, 0.35355338
  %v767 = vmul.f32 %v457, 0.35355338
  %v768 = vmul.f32 %v533, 0.35355338
  %v769 = vmul.f32 %v609, 0.35355338
  %v770 = vmul.f32 %v685, 0.35355338
  %v771 = vmul.f32 %v761, 0.35355338
  %v772 = vsel %vm157, %v764, -inf
  %773 = vmax.xlane.f32.xlu0 %v772
  %v774 = vpop.xlane.xlu0 %773
  %v775 = vsel %vm157, %v765, -inf
  %776 = vmax.xlane.f32.xlu0 %v775
  %v777 = vpop.xlane.xlu0 %776
  %v778 = vsel %vm157, %v766, -inf
  %779 = vmax.xlane.f32.xlu0 %v778
  %v780 = vpop.xlane.xlu0 %779
  %v781 = vsel %vm157, %v767, -inf
  %782 = vmax.xlane.f32.xlu0 %v781
  %v783 = vpop.xlane.xlu0 %782
  %v784 = vsel %vm157, %v768, -inf
  %785 = vmax.xlane.f32.xlu0 %v784
  %v786 = vpop.xlane.xlu0 %785
  %v787 = vsel %vm157, %v769, -inf
  %788 = vmax.xlane.f32.xlu0 %v787
  %v789 = vpop.xlane.xlu0 %788
  %v790 = vsel %vm157, %v770, -inf
  %791 = vmax.xlane.f32.xlu0 %v790
  %v792 = vpop.xlane.xlu0 %791
  %v793 = vsel %vm157, %v771, -inf
  %794 = vmax.xlane.f32.xlu0 %v793
  %v795 = vpop.xlane.xlu0 %794
  %v796 = vsub.f32 %v764, %v774
  %v797 = vsub.f32 %v765, %v777
  %v798 = vsub.f32 %v766, %v780
  %v799 = vsub.f32 %v767, %v783
  %v800 = vsub.f32 %v768, %v786
  %v801 = vsub.f32 %v769, %v789
  %v802 = vsub.f32 %v770, %v792
  %v803 = vsub.f32 %v771, %v795
  %v804 = vmul.f32 %v796, 1.442695
  %v805 = vpow.pop %v804
  %v806 = vmul.f32 %v797, 1.442695
  %v807 = vpow.pop %v806
  %v808 = vmul.f32 %v798, 1.442695
  %v809 = vpow.pop %v808
  %v810 = vmul.f32 %v799, 1.442695
  %v811 = vpow.pop %v810
  %v812 = vmul.f32 %v800, 1.442695
  %v813 = vpow.pop %v812
  %v814 = vmul.f32 %v801, 1.442695
  %v815 = vpow.pop %v814
  %v816 = vmul.f32 %v802, 1.442695
  %v817 = vpow.pop %v816
  %v818 = vmul.f32 %v803, 1.442695
  %v819 = vpow.pop %v818
  %v820 = vsel %vm157, %v805, 0.0
  %821 = vadd.xlane.f32.xlu0 %v820
  %v822 = vpop.xlane.xlu0 %821
  %v823 = vsel %vm157, %v807, 0.0
  %824 = vadd.xlane.f32.xlu0 %v823
  %v825 = vpop.xlane.xlu0 %824
  %v826 = vsel %vm157, %v809, 0.0
  %827 = vadd.xlane.f32.xlu0 %v826
  %v828 = vpop.xlane.xlu0 %827
  %v829 = vsel %vm157, %v811, 0.0
  %830 = vadd.xlane.f32.xlu0 %v829
  %v831 = vpop.xlane.xlu0 %830
  %v832 = vsel %vm157, %v813, 0.0
  %833 = vadd.xlane.f32.xlu0 %v832
  %v834 = vpop.xlane.xlu0 %833
  %v835 = vsel %vm157, %v815, 0.0
  %836 = vadd.xlane.f32.xlu0 %v835
  %v837 = vpop.xlane.xlu0 %836
  %v838 = vsel %vm157, %v817, 0.0
  %839 = vadd.xlane.f32.xlu0 %v838
  %v840 = vpop.xlane.xlu0 %839
  %v841 = vsel %vm157, %v819, 0.0
  %842 = vadd.xlane.f32.xlu0 %v841
  %v843 = vpop.xlane.xlu0 %842
  %v844 = vrcp.pop %v822
  %v845 = vrcp.pop %v825
  %v846 = vrcp.pop %v828
  %v847 = vrcp.pop %v831
  %v848 = vrcp.pop %v834
  %v849 = vrcp.pop %v837
  %v850 = vrcp.pop %v840
  %v851 = vrcp.pop %v843
  %v852 = vmul.f32 %v805, %v844
  %v853 = vmul.f32 %v807, %v845
  %v854 = vmul.f32 %v809, %v846
  %v855 = vmul.f32 %v811, %v847
  %v856 = vmul.f32 %v813, %v848
  %v857 = vmul.f32 %v815, %v849
  %v858 = vmul.f32 %v817, %v850
  %v859 = vmul.f32 %v819, %v851
  %860 = vrot.lane.b32.xlu0 %v135, 64
  %v861 = vpop.permute.xlu0 %860
  %v864 = vsel %vm157, %v852, 0
  %866 = vmatprep.subr.mxu0 0.0
  %867 = vmatpush1.msra.mxu0 %v861
  %868 = vmatprep.subr.mxu0 0.0
  %869 = vmatpush1.msra.mxu0 0.0
  %870 = vmatprep.subr.mxu0 0.0
  %871 = vmatpush1.msra.mxu0 0.0
  %872 = vmatprep.subr.mxu0 0.0
  %873 = vmatpush1.msra.mxu0 0.0
  %874 = vmatprep.subr.mxu0 0.0
  %875 = vmatpush1.msra.mxu0 0.0
  %876 = vmatprep.subr.mxu0 0.0
  %877 = vmatpush1.msra.mxu0 0.0
  %878 = vmatprep.subr.mxu0 0.0
  %879 = vmatpush1.msra.mxu0 0.0
  %880 = vmatprep.subr.mxu0 0.0
  %881 = vmatpush1.msra.mxu0 0.0
  %882 = vmatprep.subr.mxu0 0.0
  %883 = vmatpush1.msra.mxu0 0.0
  %884 = vmatprep.subr.mxu0 0.0
  %885 = vmatpush1.msra.mxu0 0.0
  %886 = vmatprep.subr.mxu0 0.0
  %887 = vmatpush1.msra.mxu0 0.0
  %888 = vmatprep.subr.mxu0 0.0
  %889 = vmatpush1.msra.mxu0 0.0
  %890 = vmatprep.subr.mxu0 0.0
  %891 = vmatpush1.msra.mxu0 0.0
  %892 = vmatprep.subr.mxu0 0.0
  %893 = vmatpush1.msra.mxu0 0.0
  %894 = vmatprep.subr.mxu0 0.0
  %895 = vmatpush1.msra.mxu0 0.0
  %896 = vmatprep.subr.mxu0 0.0
  %897 = vmatpush1.msra.mxu0 0.0
  %898 = vmatprep.subr.mxu0 0.0
  %899 = vmatpush1.msra.mxu0 0.0
  %900 = vmatprep.subr.mxu0 0.0
  %901 = vmatpush1.msra.mxu0 0.0
  %902 = vmatprep.subr.mxu0 0.0
  %903 = vmatpush1.msra.mxu0 0.0
  %904 = vmatprep.subr.mxu0 0.0
  %905 = vmatpush1.msra.mxu0 0.0
  %906 = vmatprep.subr.mxu0 0.0
  %907 = vmatpush1.msra.mxu0 0.0
  %908 = vmatprep.subr.mxu0 0.0
  %909 = vmatpush1.msra.mxu0 0.0
  %910 = vmatprep.subr.mxu0 0.0
  %911 = vmatpush1.msra.mxu0 0.0
  %912 = vmatprep.subr.mxu0 0.0
  %913 = vmatpush1.msra.mxu0 0.0
  %914 = vmatprep.subr.mxu0 0.0
  %915 = vmatpush1.msra.mxu0 0.0
  %916 = vmatprep.subr.mxu0 0.0
  %917 = vmatpush1.msra.mxu0 0.0
  %918 = vmatprep.subr.mxu0 0.0
  %919 = vmatpush1.msra.mxu0 0.0
  %920 = vmatprep.subr.mxu0 0.0
  %921 = vmatpush1.msra.mxu0 0.0
  %922 = vmatprep.subr.mxu0 0.0
  %923 = vmatpush1.msra.mxu0 0.0
  %924 = vmatprep.subr.mxu0 0.0
  %925 = vmatpush1.msra.mxu0 0.0
  %926 = vmatprep.subr.mxu0 0.0
  %927 = vmatpush1.msra.mxu0 0.0
  %928 = vmatprep.subr.mxu0 0.0
  %929 = vmatpush1.msra.mxu0 0.0
  %930 = vmatprep.mubr.f32.mxu0 0.0
  %931 = vmatmul.mubr.f32.gmra.mrb[0].mxu0 %v864
  %v932 = vpop.f32.mrb[0].mxu0
  %v933 = vadd.f32 0.0, %v932
  %v934 = vpop.f32.mrb[0].mxu0
  %935 = vdwg.mxu0
  %936 = vrot.lane.b32.xlu0 %v138, 64
  %v937 = vpop.permute.xlu0 %936
  %v940 = vsel %vm157, %v853, 0
  %942 = vmatprep.subr.mxu0 0.0
  %943 = vmatpush1.msra.mxu0 %v937
  %944 = vmatprep.subr.mxu0 0.0
  %945 = vmatpush1.msra.mxu0 0.0
  %946 = vmatprep.subr.mxu0 0.0
  %947 = vmatpush1.msra.mxu0 0.0
  %948 = vmatprep.subr.mxu0 0.0
  %949 = vmatpush1.msra.mxu0 0.0
  %950 = vmatprep.subr.mxu0 0.0
  %951 = vmatpush1.msra.mxu0 0.0
  %952 = vmatprep.subr.mxu0 0.0
  %953 = vmatpush1.msra.mxu0 0.0
  %954 = vmatprep.subr.mxu0 0.0
  %955 = vmatpush1.msra.mxu0 0.0
  %956 = vmatprep.subr.mxu0 0.0
  %957 = vmatpush1.msra.mxu0 0.0
  %958 = vmatprep.subr.mxu0 0.0
  %959 = vmatpush1.msra.mxu0 0.0
  %960 = vmatprep.subr.mxu0 0.0
  %961 = vmatpush1.msra.mxu0 0.0
  %962 = vmatprep.subr.mxu0 0.0
  %963 = vmatpush1.msra.mxu0 0.0
  %964 = vmatprep.subr.mxu0 0.0
  %965 = vmatpush1.msra.mxu0 0.0
  %966 = vmatprep.subr.mxu0 0.0
  %967 = vmatpush1.msra.mxu0 0.0
  %968 = vmatprep.subr.mxu0 0.0
  %969 = vmatpush1.msra.mxu0 0.0
  %970 = vmatprep.subr.mxu0 0.0
  %971 = vmatpush1.msra.mxu0 0.0
  %972 = vmatprep.subr.mxu0 0.0
  %973 = vmatpush1.msra.mxu0 0.0
  %974 = vmatprep.subr.mxu0 0.0
  %975 = vmatpush1.msra.mxu0 0.0
  %976 = vmatprep.subr.mxu0 0.0
  %977 = vmatpush1.msra.mxu0 0.0
  %978 = vmatprep.subr.mxu0 0.0
  %979 = vmatpush1.msra.mxu0 0.0
  %980 = vmatprep.subr.mxu0 0.0
  %981 = vmatpush1.msra.mxu0 0.0
  %982 = vmatprep.subr.mxu0 0.0
  %983 = vmatpush1.msra.mxu0 0.0
  %984 = vmatprep.subr.mxu0 0.0
  %985 = vmatpush1.msra.mxu0 0.0
  %986 = vmatprep.subr.mxu0 0.0
  %987 = vmatpush1.msra.mxu0 0.0
  %988 = vmatprep.subr.mxu0 0.0
  %989 = vmatpush1.msra.mxu0 0.0
  %990 = vmatprep.subr.mxu0 0.0
  %991 = vmatpush1.msra.mxu0 0.0
  %992 = vmatprep.subr.mxu0 0.0
  %993 = vmatpush1.msra.mxu0 0.0
  %994 = vmatprep.subr.mxu0 0.0
  %995 = vmatpush1.msra.mxu0 0.0
  %996 = vmatprep.subr.mxu0 0.0
  %997 = vmatpush1.msra.mxu0 0.0
  %998 = vmatprep.subr.mxu0 0.0
  %999 = vmatpush1.msra.mxu0 0.0
  %1000 = vmatprep.subr.mxu0 0.0
  %1001 = vmatpush1.msra.mxu0 0.0
  %1002 = vmatprep.subr.mxu0 0.0
  %1003 = vmatpush1.msra.mxu0 0.0
  %1004 = vmatprep.subr.mxu0 0.0
  %1005 = vmatpush1.msra.mxu0 0.0
  %1006 = vmatprep.mubr.f32.mxu0 0.0
  %1007 = vmatmul.mubr.f32.gmra.mrb[0].mxu0 %v940
  %v1008 = vpop.f32.mrb[0].mxu0
  %v1009 = vadd.f32 0.0, %v1008
  %v1010 = vpop.f32.mrb[0].mxu0
  %1011 = vdwg.mxu0
  %1012 = vrot.lane.b32.xlu0 %v144, 64
  %v1013 = vpop.permute.xlu0 %1012
  %v1016 = vsel %vm157, %v854, 0
  %1018 = vmatprep.subr.mxu0 0.0
  %1019 = vmatpush1.msra.mxu0 %v1013
  %1020 = vmatprep.subr.mxu0 0.0
  %1021 = vmatpush1.msra.mxu0 0.0
  %1022 = vmatprep.subr.mxu0 0.0
  %1023 = vmatpush1.msra.mxu0 0.0
  %1024 = vmatprep.subr.mxu0 0.0
  %1025 = vmatpush1.msra.mxu0 0.0
  %1026 = vmatprep.subr.mxu0 0.0
  %1027 = vmatpush1.msra.mxu0 0.0
  %1028 = vmatprep.subr.mxu0 0.0
  %1029 = vmatpush1.msra.mxu0 0.0
  %1030 = vmatprep.subr.mxu0 0.0
  %1031 = vmatpush1.msra.mxu0 0.0
  %1032 = vmatprep.subr.mxu0 0.0
  %1033 = vmatpush1.msra.mxu0 0.0
  %1034 = vmatprep.subr.mxu0 0.0
  %1035 = vmatpush1.msra.mxu0 0.0
  %1036 = vmatprep.subr.mxu0 0.0
  %1037 = vmatpush1.msra.mxu0 0.0
  %1038 = vmatprep.subr.mxu0 0.0
  %1039 = vmatpush1.msra.mxu0 0.0
  %1040 = vmatprep.subr.mxu0 0.0
  %1041 = vmatpush1.msra.mxu0 0.0
  %1042 = vmatprep.subr.mxu0 0.0
  %1043 = vmatpush1.msra.mxu0 0.0
  %1044 = vmatprep.subr.mxu0 0.0
  %1045 = vmatpush1.msra.mxu0 0.0
  %1046 = vmatprep.subr.mxu0 0.0
  %1047 = vmatpush1.msra.mxu0 0.0
  %1048 = vmatprep.subr.mxu0 0.0
  %1049 = vmatpush1.msra.mxu0 0.0
  %1050 = vmatprep.subr.mxu0 0.0
  %1051 = vmatpush1.msra.mxu0 0.0
  %1052 = vmatprep.subr.mxu0 0.0
  %1053 = vmatpush1.msra.mxu0 0.0
  %1054 = vmatprep.subr.mxu0 0.0
  %1055 = vmatpush1.msra.mxu0 0.0
  %1056 = vmatprep.subr.mxu0 0.0
  %1057 = vmatpush1.msra.mxu0 0.0
  %1058 = vmatprep.subr.mxu0 0.0
  %1059 = vmatpush1.msra.mxu0 0.0
  %1060 = vmatprep.subr.mxu0 0.0
  %1061 = vmatpush1.msra.mxu0 0.0
  %1062 = vmatprep.subr.mxu0 0.0
  %1063 = vmatpush1.msra.mxu0 0.0
  %1064 = vmatprep.subr.mxu0 0.0
  %1065 = vmatpush1.msra.mxu0 0.0
  %1066 = vmatprep.subr.mxu0 0.0
  %1067 = vmatpush1.msra.mxu0 0.0
  %1068 = vmatprep.subr.mxu0 0.0
  %1069 = vmatpush1.msra.mxu0 0.0
  %1070 = vmatprep.subr.mxu0 0.0
  %1071 = vmatpush1.msra.mxu0 0.0
  %1072 = vmatprep.subr.mxu0 0.0
  %1073 = vmatpush1.msra.mxu0 0.0
  %1074 = vmatprep.subr.mxu0 0.0
  %1075 = vmatpush1.msra.mxu0 0.0
  %1076 = vmatprep.subr.mxu0 0.0
  %1077 = vmatpush1.msra.mxu0 0.0
  %1078 = vmatprep.subr.mxu0 0.0
  %1079 = vmatpush1.msra.mxu0 0.0
  %1080 = vmatprep.subr.mxu0 0.0
  %1081 = vmatpush1.msra.mxu0 0.0
  %1082 = vmatprep.mubr.f32.mxu0 0.0
  %1083 = vmatmul.mubr.f32.gmra.mrb[0].mxu0 %v1016
  %v1084 = vpop.f32.mrb[0].mxu0
  %v1085 = vadd.f32 0.0, %v1084
  %v1086 = vpop.f32.mrb[0].mxu0
  %1087 = vdwg.mxu0
  %1088 = vrot.lane.b32.xlu0 %v146, 64
  %v1089 = vpop.permute.xlu0 %1088
  %v1092 = vsel %vm157, %v855, 0
  %1094 = vmatprep.subr.mxu0 0.0
  %1095 = vmatpush1.msra.mxu0 %v1089
  %1096 = vmatprep.subr.mxu0 0.0
  %1097 = vmatpush1.msra.mxu0 0.0
  %1098 = vmatprep.subr.mxu0 0.0
  %1099 = vmatpush1.msra.mxu0 0.0
  %1100 = vmatprep.subr.mxu0 0.0
  %1101 = vmatpush1.msra.mxu0 0.0
  %1102 = vmatprep.subr.mxu0 0.0
  %1103 = vmatpush1.msra.mxu0 0.0
  %1104 = vmatprep.subr.mxu0 0.0
  %1105 = vmatpush1.msra.mxu0 0.0
  %1106 = vmatprep.subr.mxu0 0.0
  %1107 = vmatpush1.msra.mxu0 0.0
  %1108 = vmatprep.subr.mxu0 0.0
  %1109 = vmatpush1.msra.mxu0 0.0
  %1110 = vmatprep.subr.mxu0 0.0
  %1111 = vmatpush1.msra.mxu0 0.0
  %1112 = vmatprep.subr.mxu0 0.0
  %1113 = vmatpush1.msra.mxu0 0.0
  %1114 = vmatprep.subr.mxu0 0.0
  %1115 = vmatpush1.msra.mxu0 0.0
  %1116 = vmatprep.subr.mxu0 0.0
  %1117 = vmatpush1.msra.mxu0 0.0
  %1118 = vmatprep.subr.mxu0 0.0
  %1119 = vmatpush1.msra.mxu0 0.0
  %1120 = vmatprep.subr.mxu0 0.0
  %1121 = vmatpush1.msra.mxu0 0.0
  %1122 = vmatprep.subr.mxu0 0.0
  %1123 = vmatpush1.msra.mxu0 0.0
  %1124 = vmatprep.subr.mxu0 0.0
  %1125 = vmatpush1.msra.mxu0 0.0
  %1126 = vmatprep.subr.mxu0 0.0
  %1127 = vmatpush1.msra.mxu0 0.0
  %1128 = vmatprep.subr.mxu0 0.0
  %1129 = vmatpush1.msra.mxu0 0.0
  %1130 = vmatprep.subr.mxu0 0.0
  %1131 = vmatpush1.msra.mxu0 0.0
  %1132 = vmatprep.subr.mxu0 0.0
  %1133 = vmatpush1.msra.mxu0 0.0
  %1134 = vmatprep.subr.mxu0 0.0
  %1135 = vmatpush1.msra.mxu0 0.0
  %1136 = vmatprep.subr.mxu0 0.0
  %1137 = vmatpush1.msra.mxu0 0.0
  %1138 = vmatprep.subr.mxu0 0.0
  %1139 = vmatpush1.msra.mxu0 0.0
  %1140 = vmatprep.subr.mxu0 0.0
  %1141 = vmatpush1.msra.mxu0 0.0
  %1142 = vmatprep.subr.mxu0 0.0
  %1143 = vmatpush1.msra.mxu0 0.0
  %1144 = vmatprep.subr.mxu0 0.0
  %1145 = vmatpush1.msra.mxu0 0.0
  %1146 = vmatprep.subr.mxu0 0.0
  %1147 = vmatpush1.msra.mxu0 0.0
  %1148 = vmatprep.subr.mxu0 0.0
  %1149 = vmatpush1.msra.mxu0 0.0
  %1150 = vmatprep.subr.mxu0 0.0
  %1151 = vmatpush1.msra.mxu0 0.0
  %1152 = vmatprep.subr.mxu0 0.0
  %1153 = vmatpush1.msra.mxu0 0.0
  %1154 = vmatprep.subr.mxu0 0.0
  %1155 = vmatpush1.msra.mxu0 0.0
  %1156 = vmatprep.subr.mxu0 0.0
  %1157 = vmatpush1.msra.mxu0 0.0
  %1158 = vmatprep.mubr.f32.mxu0 0.0
  %1159 = vmatmul.mubr.f32.gmra.mrb[0].mxu0 %v1092
  %v1160 = vpop.f32.mrb[0].mxu0
  %v1161 = vadd.f32 0.0, %v1160
  %v1162 = vpop.f32.mrb[0].mxu0
  %1163 = vdwg.mxu0
  %1164 = vrot.lane.b32.xlu0 %v148, 64
  %v1165 = vpop.permute.xlu0 %1164
  %v1168 = vsel %vm157, %v856, 0
  %1170 = vmatprep.subr.mxu0 0.0
  %1171 = vmatpush1.msra.mxu0 %v1165
  %1172 = vmatprep.subr.mxu0 0.0
  %1173 = vmatpush1.msra.mxu0 0.0
  %1174 = vmatprep.subr.mxu0 0.0
  %1175 = vmatpush1.msra.mxu0 0.0
  %1176 = vmatprep.subr.mxu0 0.0
  %1177 = vmatpush1.msra.mxu0 0.0
  %1178 = vmatprep.subr.mxu0 0.0
  %1179 = vmatpush1.msra.mxu0 0.0
  %1180 = vmatprep.subr.mxu0 0.0
  %1181 = vmatpush1.msra.mxu0 0.0
  %1182 = vmatprep.subr.mxu0 0.0
  %1183 = vmatpush1.msra.mxu0 0.0
  %1184 = vmatprep.subr.mxu0 0.0
  %1185 = vmatpush1.msra.mxu0 0.0
  %1186 = vmatprep.subr.mxu0 0.0
  %1187 = vmatpush1.msra.mxu0 0.0
  %1188 = vmatprep.subr.mxu0 0.0
  %1189 = vmatpush1.msra.mxu0 0.0
  %1190 = vmatprep.subr.mxu0 0.0
  %1191 = vmatpush1.msra.mxu0 0.0
  %1192 = vmatprep.subr.mxu0 0.0
  %1193 = vmatpush1.msra.mxu0 0.0
  %1194 = vmatprep.subr.mxu0 0.0
  %1195 = vmatpush1.msra.mxu0 0.0
  %1196 = vmatprep.subr.mxu0 0.0
  %1197 = vmatpush1.msra.mxu0 0.0
  %1198 = vmatprep.subr.mxu0 0.0
  %1199 = vmatpush1.msra.mxu0 0.0
  %1200 = vmatprep.subr.mxu0 0.0
  %1201 = vmatpush1.msra.mxu0 0.0
  %1202 = vmatprep.subr.mxu0 0.0
  %1203 = vmatpush1.msra.mxu0 0.0
  %1204 = vmatprep.subr.mxu0 0.0
  %1205 = vmatpush1.msra.mxu0 0.0
  %1206 = vmatprep.subr.mxu0 0.0
  %1207 = vmatpush1.msra.mxu0 0.0
  %1208 = vmatprep.subr.mxu0 0.0
  %1209 = vmatpush1.msra.mxu0 0.0
  %1210 = vmatprep.subr.mxu0 0.0
  %1211 = vmatpush1.msra.mxu0 0.0
  %1212 = vmatprep.subr.mxu0 0.0
  %1213 = vmatpush1.msra.mxu0 0.0
  %1214 = vmatprep.subr.mxu0 0.0
  %1215 = vmatpush1.msra.mxu0 0.0
  %1216 = vmatprep.subr.mxu0 0.0
  %1217 = vmatpush1.msra.mxu0 0.0
  %1218 = vmatprep.subr.mxu0 0.0
  %1219 = vmatpush1.msra.mxu0 0.0
  %1220 = vmatprep.subr.mxu0 0.0
  %1221 = vmatpush1.msra.mxu0 0.0
  %1222 = vmatprep.subr.mxu0 0.0
  %1223 = vmatpush1.msra.mxu0 0.0
  %1224 = vmatprep.subr.mxu0 0.0
  %1225 = vmatpush1.msra.mxu0 0.0
  %1226 = vmatprep.subr.mxu0 0.0
  %1227 = vmatpush1.msra.mxu0 0.0
  %1228 = vmatprep.subr.mxu0 0.0
  %1229 = vmatpush1.msra.mxu0 0.0
  %1230 = vmatprep.subr.mxu0 0.0
  %1231 = vmatpush1.msra.mxu0 0.0
  %1232 = vmatprep.subr.mxu0 0.0
  %1233 = vmatpush1.msra.mxu0 0.0
  %1234 = vmatprep.mubr.f32.mxu0 0.0
  %1235 = vmatmul.mubr.f32.gmra.mrb[0].mxu0 %v1168
  %v1236 = vpop.f32.mrb[0].mxu0
  %v1237 = vadd.f32 0.0, %v1236
  %v1238 = vpop.f32.mrb[0].mxu0
  %1239 = vdwg.mxu0
  %1240 = vrot.lane.b32.xlu0 %v150, 64
  %v1241 = vpop.permute.xlu0 %1240
  %v1244 = vsel %vm157, %v857, 0
  %1246 = vmatprep.subr.mxu0 0.0
  %1247 = vmatpush1.msra.mxu0 %v1241
  %1248 = vmatprep.subr.mxu0 0.0
  %1249 = vmatpush1.msra.mxu0 0.0
  %1250 = vmatprep.subr.mxu0 0.0
  %1251 = vmatpush1.msra.mxu0 0.0
  %1252 = vmatprep.subr.mxu0 0.0
  %1253 = vmatpush1.msra.mxu0 0.0
  %1254 = vmatprep.subr.mxu0 0.0
  %1255 = vmatpush1.msra.mxu0 0.0
  %1256 = vmatprep.subr.mxu0 0.0
  %1257 = vmatpush1.msra.mxu0 0.0
  %1258 = vmatprep.subr.mxu0 0.0
  %1259 = vmatpush1.msra.mxu0 0.0
  %1260 = vmatprep.subr.mxu0 0.0
  %1261 = vmatpush1.msra.mxu0 0.0
  %1262 = vmatprep.subr.mxu0 0.0
  %1263 = vmatpush1.msra.mxu0 0.0
  %1264 = vmatprep.subr.mxu0 0.0
  %1265 = vmatpush1.msra.mxu0 0.0
  %1266 = vmatprep.subr.mxu0 0.0
  %1267 = vmatpush1.msra.mxu0 0.0
  %1268 = vmatprep.subr.mxu0 0.0
  %1269 = vmatpush1.msra.mxu0 0.0
  %1270 = vmatprep.subr.mxu0 0.0
  %1271 = vmatpush1.msra.mxu0 0.0
  %1272 = vmatprep.subr.mxu0 0.0
  %1273 = vmatpush1.msra.mxu0 0.0
  %1274 = vmatprep.subr.mxu0 0.0
  %1275 = vmatpush1.msra.mxu0 0.0
  %1276 = vmatprep.subr.mxu0 0.0
  %1277 = vmatpush1.msra.mxu0 0.0
  %1278 = vmatprep.subr.mxu0 0.0
  %1279 = vmatpush1.msra.mxu0 0.0
  %1280 = vmatprep.subr.mxu0 0.0
  %1281 = vmatpush1.msra.mxu0 0.0
  %1282 = vmatprep.subr.mxu0 0.0
  %1283 = vmatpush1.msra.mxu0 0.0
  %1284 = vmatprep.subr.mxu0 0.0
  %1285 = vmatpush1.msra.mxu0 0.0
  %1286 = vmatprep.subr.mxu0 0.0
  %1287 = vmatpush1.msra.mxu0 0.0
  %1288 = vmatprep.subr.mxu0 0.0
  %1289 = vmatpush1.msra.mxu0 0.0
  %1290 = vmatprep.subr.mxu0 0.0
  %1291 = vmatpush1.msra.mxu0 0.0
  %1292 = vmatprep.subr.mxu0 0.0
  %1293 = vmatpush1.msra.mxu0 0.0
  %1294 = vmatprep.subr.mxu0 0.0
  %1295 = vmatpush1.msra.mxu0 0.0
  %1296 = vmatprep.subr.mxu0 0.0
  %1297 = vmatpush1.msra.mxu0 0.0
  %1298 = vmatprep.subr.mxu0 0.0
  %1299 = vmatpush1.msra.mxu0 0.0
  %1300 = vmatprep.subr.mxu0 0.0
  %1301 = vmatpush1.msra.mxu0 0.0
  %1302 = vmatprep.subr.mxu0 0.0
  %1303 = vmatpush1.msra.mxu0 0.0
  %1304 = vmatprep.subr.mxu0 0.0
  %1305 = vmatpush1.msra.mxu0 0.0
  %1306 = vmatprep.subr.mxu0 0.0
  %1307 = vmatpush1.msra.mxu0 0.0
  %1308 = vmatprep.subr.mxu0 0.0
  %1309 = vmatpush1.msra.mxu0 0.0
  %1310 = vmatprep.mubr.f32.mxu0 0.0
  %1311 = vmatmul.mubr.f32.gmra.mrb[0].mxu0 %v1244
  %v1312 = vpop.f32.mrb[0].mxu0
  %v1313 = vadd.f32 0.0, %v1312
  %v1314 = vpop.f32.mrb[0].mxu0
  %1315 = vdwg.mxu0
  %1316 = vrot.lane.b32.xlu0 %v152, 64
  %v1317 = vpop.permute.xlu0 %1316
  %v1320 = vsel %vm157, %v858, 0
  %1322 = vmatprep.subr.mxu0 0.0
  %1323 = vmatpush1.msra.mxu0 %v1317
  %1324 = vmatprep.subr.mxu0 0.0
  %1325 = vmatpush1.msra.mxu0 0.0
  %1326 = vmatprep.subr.mxu0 0.0
  %1327 = vmatpush1.msra.mxu0 0.0
  %1328 = vmatprep.subr.mxu0 0.0
  %1329 = vmatpush1.msra.mxu0 0.0
  %1330 = vmatprep.subr.mxu0 0.0
  %1331 = vmatpush1.msra.mxu0 0.0
  %1332 = vmatprep.subr.mxu0 0.0
  %1333 = vmatpush1.msra.mxu0 0.0
  %1334 = vmatprep.subr.mxu0 0.0
  %1335 = vmatpush1.msra.mxu0 0.0
  %1336 = vmatprep.subr.mxu0 0.0
  %1337 = vmatpush1.msra.mxu0 0.0
  %1338 = vmatprep.subr.mxu0 0.0
  %1339 = vmatpush1.msra.mxu0 0.0
  %1340 = vmatprep.subr.mxu0 0.0
  %1341 = vmatpush1.msra.mxu0 0.0
  %1342 = vmatprep.subr.mxu0 0.0
  %1343 = vmatpush1.msra.mxu0 0.0
  %1344 = vmatprep.subr.mxu0 0.0
  %1345 = vmatpush1.msra.mxu0 0.0
  %1346 = vmatprep.subr.mxu0 0.0
  %1347 = vmatpush1.msra.mxu0 0.0
  %1348 = vmatprep.subr.mxu0 0.0
  %1349 = vmatpush1.msra.mxu0 0.0
  %1350 = vmatprep.subr.mxu0 0.0
  %1351 = vmatpush1.msra.mxu0 0.0
  %1352 = vmatprep.subr.mxu0 0.0
  %1353 = vmatpush1.msra.mxu0 0.0
  %1354 = vmatprep.subr.mxu0 0.0
  %1355 = vmatpush1.msra.mxu0 0.0
  %1356 = vmatprep.subr.mxu0 0.0
  %1357 = vmatpush1.msra.mxu0 0.0
  %1358 = vmatprep.subr.mxu0 0.0
  %1359 = vmatpush1.msra.mxu0 0.0
  %1360 = vmatprep.subr.mxu0 0.0
  %1361 = vmatpush1.msra.mxu0 0.0
  %1362 = vmatprep.subr.mxu0 0.0
  %1363 = vmatpush1.msra.mxu0 0.0
  %1364 = vmatprep.subr.mxu0 0.0
  %1365 = vmatpush1.msra.mxu0 0.0
  %1366 = vmatprep.subr.mxu0 0.0
  %1367 = vmatpush1.msra.mxu0 0.0
  %1368 = vmatprep.subr.mxu0 0.0
  %1369 = vmatpush1.msra.mxu0 0.0
  %1370 = vmatprep.subr.mxu0 0.0
  %1371 = vmatpush1.msra.mxu0 0.0
  %1372 = vmatprep.subr.mxu0 0.0
  %1373 = vmatpush1.msra.mxu0 0.0
  %1374 = vmatprep.subr.mxu0 0.0
  %1375 = vmatpush1.msra.mxu0 0.0
  %1376 = vmatprep.subr.mxu0 0.0
  %1377 = vmatpush1.msra.mxu0 0.0
  %1378 = vmatprep.subr.mxu0 0.0
  %1379 = vmatpush1.msra.mxu0 0.0
  %1380 = vmatprep.subr.mxu0 0.0
  %1381 = vmatpush1.msra.mxu0 0.0
  %1382 = vmatprep.subr.mxu0 0.0
  %1383 = vmatpush1.msra.mxu0 0.0
  %1384 = vmatprep.subr.mxu0 0.0
  %1385 = vmatpush1.msra.mxu0 0.0
  %1386 = vmatprep.mubr.f32.mxu0 0.0
  %1387 = vmatmul.mubr.f32.gmra.mrb[0].mxu0 %v1320
  %v1388 = vpop.f32.mrb[0].mxu0
  %v1389 = vadd.f32 0.0, %v1388
  %v1390 = vpop.f32.mrb[0].mxu0
  %1391 = vdwg.mxu0
  %1392 = vrot.lane.b32.xlu0 %v154, 64
  %v1393 = vpop.permute.xlu0 %1392
  %v1396 = vsel %vm157, %v859, 0
  %1398 = vmatprep.subr.mxu0 0.0
  %1399 = vmatpush1.msra.mxu0 %v1393
  %1400 = vmatprep.subr.mxu0 0.0
  %1401 = vmatpush1.msra.mxu0 0.0
  %1402 = vmatprep.subr.mxu0 0.0
  %1403 = vmatpush1.msra.mxu0 0.0
  %1404 = vmatprep.subr.mxu0 0.0
  %1405 = vmatpush1.msra.mxu0 0.0
  %1406 = vmatprep.subr.mxu0 0.0
  %1407 = vmatpush1.msra.mxu0 0.0
  %1408 = vmatprep.subr.mxu0 0.0
  %1409 = vmatpush1.msra.mxu0 0.0
  %1410 = vmatprep.subr.mxu0 0.0
  %1411 = vmatpush1.msra.mxu0 0.0
  %1412 = vmatprep.subr.mxu0 0.0
  %1413 = vmatpush1.msra.mxu0 0.0
  %1414 = vmatprep.subr.mxu0 0.0
  %1415 = vmatpush1.msra.mxu0 0.0
  %1416 = vmatprep.subr.mxu0 0.0
  %1417 = vmatpush1.msra.mxu0 0.0
  %1418 = vmatprep.subr.mxu0 0.0
  %1419 = vmatpush1.msra.mxu0 0.0
  %1420 = vmatprep.subr.mxu0 0.0
  %1421 = vmatpush1.msra.mxu0 0.0
  %1422 = vmatprep.subr.mxu0 0.0
  %1423 = vmatpush1.msra.mxu0 0.0
  %1424 = vmatprep.subr.mxu0 0.0
  %1425 = vmatpush1.msra.mxu0 0.0
  %1426 = vmatprep.subr.mxu0 0.0
  %1427 = vmatpush1.msra.mxu0 0.0
  %1428 = vmatprep.subr.mxu0 0.0
  %1429 = vmatpush1.msra.mxu0 0.0
  %1430 = vmatprep.subr.mxu0 0.0
  %1431 = vmatpush1.msra.mxu0 0.0
  %1432 = vmatprep.subr.mxu0 0.0
  %1433 = vmatpush1.msra.mxu0 0.0
  %1434 = vmatprep.subr.mxu0 0.0
  %1435 = vmatpush1.msra.mxu0 0.0
  %1436 = vmatprep.subr.mxu0 0.0
  %1437 = vmatpush1.msra.mxu0 0.0
  %1438 = vmatprep.subr.mxu0 0.0
  %1439 = vmatpush1.msra.mxu0 0.0
  %1440 = vmatprep.subr.mxu0 0.0
  %1441 = vmatpush1.msra.mxu0 0.0
  %1442 = vmatprep.subr.mxu0 0.0
  %1443 = vmatpush1.msra.mxu0 0.0
  %1444 = vmatprep.subr.mxu0 0.0
  %1445 = vmatpush1.msra.mxu0 0.0
  %1446 = vmatprep.subr.mxu0 0.0
  %1447 = vmatpush1.msra.mxu0 0.0
  %1448 = vmatprep.subr.mxu0 0.0
  %1449 = vmatpush1.msra.mxu0 0.0
  %1450 = vmatprep.subr.mxu0 0.0
  %1451 = vmatpush1.msra.mxu0 0.0
  %1452 = vmatprep.subr.mxu0 0.0
  %1453 = vmatpush1.msra.mxu0 0.0
  %1454 = vmatprep.subr.mxu0 0.0
  %1455 = vmatpush1.msra.mxu0 0.0
  %1456 = vmatprep.subr.mxu0 0.0
  %1457 = vmatpush1.msra.mxu0 0.0
  %1458 = vmatprep.subr.mxu0 0.0
  %1459 = vmatpush1.msra.mxu0 0.0
  %1460 = vmatprep.subr.mxu0 0.0
  %1461 = vmatpush1.msra.mxu0 0.0
  %1462 = vmatprep.mubr.f32.mxu0 0.0
  %1463 = vmatmul.mubr.f32.gmra.mrb[0].mxu0 %v1396
  %v1464 = vpop.f32.mrb[0].mxu0
  %v1465 = vadd.f32 0.0, %v1464
  %v1466 = vpop.f32.mrb[0].mxu0
  %1467 = vdwg.mxu0
  %1470 = vrot.lane.b32.xlu0 %v1085, 8
  %v1471 = vpop.permute.xlu0 %1470
  %1472 = vrot.lane.b32.xlu0 %v1161, 8
  %v1473 = vpop.permute.xlu0 %1472
  %1478 = vrot.lane.b32.xlu0 %v1237, 16
  %v1479 = vpop.permute.xlu0 %1478
  %1480 = vrot.lane.b32.xlu0 %v1313, 16
  %v1481 = vpop.permute.xlu0 %1480
  %1486 = vrot.lane.b32.xlu0 %v1389, 24
  %v1487 = vpop.permute.xlu0 %1486
  %1488 = vrot.lane.b32.xlu0 %v1465, 24
  %v1489 = vpop.permute.xlu0 %1488
  %v1492 = vsel %vm157, %v933, %v1471
  %v1493 = vsel %vm157, %v1009, %v1473
  %vm1494 = vcmask 130048
  %v1495 = vsel %vm1494, %v1492, %v1479
  %v1496 = vsel %vm1494, %v1493, %v1481
  %vm1497 = vcmask 195584
  %v1498 = vsel %vm1497, %v1495, %v1487
  %v1499 = vsel %vm1497, %v1496, %v1489
  %v1500 = vpack.c.bf16 %v1499, %v1498
  %v1501 = vld [vmem:[%s3] sm:$0xf]
  %v1502 = vld [vmem:[%s3 + $0x4] sm:$0xf]
  %v1503 = vld [vmem:[%s3 + $0x8] sm:$0xf]
  %v1504 = vld [vmem:[%s3 + $0xc] sm:$0xf]
  %v1505 = vlaneseq
  %v1506 = vshrl.u32 %v1505, 7
  %v1507 = vsub.s32 4, %v1506
  %v1508 = vrot.slane %v32, %v1507
  %v1513 = vunpack.c.l.b16 %v1501
  %v1514 = vunpack.c.l.b16 %v1502
  %v1515 = vunpack.c.l.b16 %v1503
  %v1516 = vunpack.c.l.b16 %v1504
  %v1517 = vpack.c.b16 %v1514, %v1513
  %v1518 = vpack.c.b16 %v1516, %v1515
  %v1522 = vsel %vm33, %v1500, 0
  %1524 = vmatprep.subr.bf16.mxu0 0
  %1525 = vmatpush1.bf16.msra.mxu0 %v1517
  %1526 = vmatprep.subr.bf16.mxu0 0
  %1527 = vmatpush1.bf16.msra.mxu0 %v1518
  %1528 = vmatprep.subr.bf16.mxu0 0
  %1529 = vmatpush1.bf16.msra.mxu0 0
  %1530 = vmatprep.subr.bf16.mxu0 0
  %1531 = vmatpush1.bf16.msra.mxu0 0
  %1532 = vmatprep.subr.bf16.mxu0 0
  %1533 = vmatpush1.bf16.msra.mxu0 0
  %1534 = vmatprep.subr.bf16.mxu0 0
  %1535 = vmatpush1.bf16.msra.mxu0 0
  %1536 = vmatprep.subr.bf16.mxu0 0
  %1537 = vmatpush1.bf16.msra.mxu0 0
  %1538 = vmatprep.subr.bf16.mxu0 0
  %1539 = vmatpush1.bf16.msra.mxu0 0
  %1540 = vmatprep.subr.bf16.mxu0 0
  %1541 = vmatpush1.bf16.msra.mxu0 0
  %1542 = vmatprep.subr.bf16.mxu0 0
  %1543 = vmatpush1.bf16.msra.mxu0 0
  %1544 = vmatprep.subr.bf16.mxu0 0
  %1545 = vmatpush1.bf16.msra.mxu0 0
  %1546 = vmatprep.subr.bf16.mxu0 0
  %1547 = vmatpush1.bf16.msra.mxu0 0
  %1548 = vmatprep.subr.bf16.mxu0 0
  %1549 = vmatpush1.bf16.msra.mxu0 0
  %1550 = vmatprep.subr.bf16.mxu0 0
  %1551 = vmatpush1.bf16.msra.mxu0 0
  %1552 = vmatprep.subr.bf16.mxu0 0
  %1553 = vmatpush1.bf16.msra.mxu0 0
  %1554 = vmatprep.subr.bf16.mxu0 0
  %1555 = vmatpush1.bf16.msra.mxu0 0
  %1556 = vmatprep.mubr.bf16.mxu0 0
  %1557 = vmatmul.mubr.bf16.gmra.mrb[0].mxu0 %v1522
  %v1558 = vpop.f32.mrb[0].mxu0
  %v1559 = vadd.f32 %v1508, %v1558
  %v1560 = vpop.f32.mrb[0].mxu0
  %v1561 = vpop.f32.mrb[0].mxu0
  %v1562 = vadd.f32 %v1508, %v1561
  %v1563 = vpop.f32.mrb[0].mxu0
  %1564 = vdwg.mxu0
  %v1565 = vadd.f32 %v30, %v1559
  %v1566 = vadd.f32 %v31, %v1562
  %v1567 = vsel %vm33, %v1565, 0.0
  %1568 = vadd.xlane.f32.xlu0 %v1567
  %v1569 = vpop.xlane.xlu0 %1568
  %v1570 = vsel %vm33, %v1566, 0.0
  %1571 = vadd.xlane.f32.xlu0 %v1570
  %v1572 = vpop.xlane.xlu0 %1571
  %v1573 = vmul.f32 %v1569, %v40
  %v1574 = vmul.f32 %v1572, %v40
  %v1575 = vsub.f32 %v1565, %v1573
  %v1576 = vsub.f32 %v1566, %v1574
  %v1577 = vmul.f32 %v1575, %v1575
  %v1578 = vmul.f32 %v1576, %v1576
  %v1579 = vsel %vm33, %v1577, 0.0
  %1580 = vadd.xlane.f32.xlu0 %v1579
  %v1581 = vpop.xlane.xlu0 %1580
  %v1582 = vsel %vm33, %v1578, 0.0
  %1583 = vadd.xlane.f32.xlu0 %v1582
  %v1584 = vpop.xlane.xlu0 %1583
  %v1585 = vmul.f32 %v1581, %v40
  %v1586 = vmul.f32 %v1584, %v40
  %v1587 = vadd.f32 %v1585, 1e-05
  %v1588 = vadd.f32 %v1586, 1e-05
  %v1589 = vrsqrt.pop %v1587
  %v1590 = vrsqrt.pop %v1588
  %v1591 = vmul.f32 %v1575, %v1589
  %v1592 = vmul.f32 %v1576, %v1590
  %v1593 = vlaneseq
  %v1594 = vshrl.u32 %v1593, 7
  %v1595 = vsub.s32 2, %v1594
  %v1596 = vrot.slane %v32, %v1595
  %v1597 = vmul.f32 %v1591, %v1596
  %v1598 = vmul.f32 %v1592, %v1596
  %v1599 = vlaneseq
  %v1600 = vshrl.u32 %v1599, 7
  %v1601 = vsub.s32 3, %v1600
  %v1602 = vrot.slane %v32, %v1601
  %v1603 = vadd.f32 %v1597, %v1602
  %v1604 = vadd.f32 %v1598, %v1602
  %v1605 = vpack.c.bf16 %v1604, %v1603
  %v1606 = vld [vmem:[%s4] sm:$0xf]
  %v1607 = vld [vmem:[%s4 + $0x4] sm:$0xf]
  %v1608 = vld [vmem:[%s4 + $0x8] sm:$0xf]
  %v1609 = vld [vmem:[%s4 + $0xc] sm:$0xf]
  %v1610 = vld [vmem:[%s5] sm:$0x1]
  %v1612 = vlaneseq
  %v1613 = vshrl.u32 %v1612, 7
  %v1614 = vsub.s32 0, %v1613
  %v1615 = vrot.slane %v1610, %v1614
  %v1621 = vunpack.c.l.b16 %v1606
  %v1622 = vunpack.c.l.b16 %v1607
  %v1623 = vunpack.c.l.b16 %v1608
  %v1624 = vunpack.c.l.b16 %v1609
  %v1625 = vpack.c.b16 %v1622, %v1621
  %v1626 = vpack.c.b16 %v1624, %v1623
  %v1630 = vsel %vm33, %v1605, 0
  %1632 = vmatprep.subr.bf16.mxu0 0
  %1633 = vmatpush1.bf16.msra.mxu0 %v1625
  %1634 = vmatprep.subr.bf16.mxu0 0
  %1635 = vmatpush1.bf16.msra.mxu0 %v1626
  %1636 = vmatprep.subr.bf16.mxu0 0
  %1637 = vmatpush1.bf16.msra.mxu0 0
  %1638 = vmatprep.subr.bf16.mxu0 0
  %1639 = vmatpush1.bf16.msra.mxu0 0
  %1640 = vmatprep.subr.bf16.mxu0 0
  %1641 = vmatpush1.bf16.msra.mxu0 0
  %1642 = vmatprep.subr.bf16.mxu0 0
  %1643 = vmatpush1.bf16.msra.mxu0 0
  %1644 = vmatprep.subr.bf16.mxu0 0
  %1645 = vmatpush1.bf16.msra.mxu0 0
  %1646 = vmatprep.subr.bf16.mxu0 0
  %1647 = vmatpush1.bf16.msra.mxu0 0
  %1648 = vmatprep.subr.bf16.mxu0 0
  %1649 = vmatpush1.bf16.msra.mxu0 0
  %1650 = vmatprep.subr.bf16.mxu0 0
  %1651 = vmatpush1.bf16.msra.mxu0 0
  %1652 = vmatprep.subr.bf16.mxu0 0
  %1653 = vmatpush1.bf16.msra.mxu0 0
  %1654 = vmatprep.subr.bf16.mxu0 0
  %1655 = vmatpush1.bf16.msra.mxu0 0
  %1656 = vmatprep.subr.bf16.mxu0 0
  %1657 = vmatpush1.bf16.msra.mxu0 0
  %1658 = vmatprep.subr.bf16.mxu0 0
  %1659 = vmatpush1.bf16.msra.mxu0 0
  %1660 = vmatprep.subr.bf16.mxu0 0
  %1661 = vmatpush1.bf16.msra.mxu0 0
  %1662 = vmatprep.subr.bf16.mxu0 0
  %1663 = vmatpush1.bf16.msra.mxu0 0
  %1664 = vmatprep.mubr.bf16.mxu0 0
  %1665 = vmatmul.mubr.bf16.gmra.mrb[0].mxu0 %v1630
  %v1666 = vpop.f32.mrb[0].mxu0
  %v1667 = vadd.f32 %v1615, %v1666
  %v1668 = vpop.f32.mrb[0].mxu0
  %v1669 = vpop.f32.mrb[0].mxu0
  %v1670 = vadd.f32 %v1615, %v1669
  %v1671 = vpop.f32.mrb[0].mxu0
  %1672 = vdwg.mxu0
  %v1673 = vmul.f32 %v1667, 0.5
  %v1674 = vmul.f32 %v1670, 0.5
  %v1675 = vmul.f32 %v1667, 0.044715
  %v1676 = vmul.f32 %v1670, 0.044715
  %v1677 = vmul.f32 %v1675, %v1667
  %v1678 = vmul.f32 %v1676, %v1670
  %v1679 = vmul.f32 %v1677, %v1667
  %v1680 = vmul.f32 %v1678, %v1670
  %v1681 = vadd.f32 %v1667, %v1679
  %v1682 = vadd.f32 %v1670, %v1680
  %v1683 = vmul.f32 %v1681, 0.7978846
  %v1684 = vmul.f32 %v1682, 0.7978846
  %v1685 = vtanh.pop %v1683
  %v1686 = vtanh.pop %v1684
  %v1687 = vadd.f32 %v1685, 1.0
  %v1688 = vadd.f32 %v1686, 1.0
  %v1689 = vmul.f32 %v1673, %v1687
  %v1690 = vmul.f32 %v1674, %v1688
  %v1691 = vpack.c.bf16 %v1690, %v1689
  %v1692 = vld [vmem:[%s6] sm:$0xf]
  %v1693 = vld [vmem:[%s6 + $0x4] sm:$0xf]
  %v1694 = vld [vmem:[%s6 + $0x8] sm:$0xf]
  %v1695 = vld [vmem:[%s6 + $0xc] sm:$0xf]
  %v1696 = vld [vmem:[%s6 + $0x10] sm:$0xf]
  %v1697 = vld [vmem:[%s6 + $0x14] sm:$0xf]
  %v1698 = vld [vmem:[%s6 + $0x18] sm:$0xf]
  %v1699 = vld [vmem:[%s6 + $0x1c] sm:$0xf]
  %v1700 = vld [vmem:[%s6 + $0x20] sm:$0xf]
  %v1701 = vld [vmem:[%s6 + $0x24] sm:$0xf]
  %v1702 = vld [vmem:[%s6 + $0x28] sm:$0xf]
  %v1703 = vld [vmem:[%s6 + $0x2c] sm:$0xf]
  %v1704 = vld [vmem:[%s6 + $0x30] sm:$0xf]
  %v1705 = vld [vmem:[%s6 + $0x34] sm:$0xf]
  %v1706 = vld [vmem:[%s6 + $0x38] sm:$0xf]
  %v1707 = vld [vmem:[%s6 + $0x3c] sm:$0xf]
  %v1708 = vlaneseq
  %v1709 = vshrl.u32 %v1708, 7
  %v1710 = vsub.s32 5, %v1709
  %v1711 = vrot.slane %v32, %v1710
  %v1728 = vunpack.c.l.b16 %v1692
  %v1729 = vunpack.c.l.b16 %v1693
  %v1730 = vunpack.c.l.b16 %v1694
  %v1731 = vunpack.c.l.b16 %v1695
  %v1732 = vunpack.c.l.b16 %v1696
  %v1733 = vunpack.c.l.b16 %v1697
  %v1734 = vunpack.c.l.b16 %v1698
  %v1735 = vunpack.c.l.b16 %v1699
  %v1736 = vunpack.c.l.b16 %v1700
  %v1737 = vunpack.c.l.b16 %v1701
  %v1738 = vunpack.c.l.b16 %v1702
  %v1739 = vunpack.c.l.b16 %v1703
  %v1740 = vunpack.c.l.b16 %v1704
  %v1741 = vunpack.c.l.b16 %v1705
  %v1742 = vunpack.c.l.b16 %v1706
  %v1743 = vunpack.c.l.b16 %v1707
  %v1744 = vpack.c.b16 %v1729, %v1728
  %v1745 = vpack.c.b16 %v1731, %v1730
  %v1746 = vpack.c.b16 %v1733, %v1732
  %v1747 = vpack.c.b16 %v1735, %v1734
  %v1748 = vpack.c.b16 %v1737, %v1736
  %v1749 = vpack.c.b16 %v1739, %v1738
  %v1750 = vpack.c.b16 %v1741, %v1740
  %v1751 = vpack.c.b16 %v1743, %v1742
  %1760 = vmatprep.subr.bf16.mxu0 0
  %1761 = vmatpush1.bf16.msra.mxu0 %v1744
  %1762 = vmatprep.subr.bf16.mxu0 0
  %1763 = vmatpush1.bf16.msra.mxu0 %v1745
  %1764 = vmatprep.subr.bf16.mxu0 0
  %1765 = vmatpush1.bf16.msra.mxu0 %v1746
  %1766 = vmatprep.subr.bf16.mxu0 0
  %1767 = vmatpush1.bf16.msra.mxu0 %v1747
  %1768 = vmatprep.subr.bf16.mxu0 0
  %1769 = vmatpush1.bf16.msra.mxu0 %v1748
  %1770 = vmatprep.subr.bf16.mxu0 0
  %1771 = vmatpush1.bf16.msra.mxu0 %v1749
  %1772 = vmatprep.subr.bf16.mxu0 0
  %1773 = vmatpush1.bf16.msra.mxu0 %v1750
  %1774 = vmatprep.subr.bf16.mxu0 0
  %1775 = vmatpush1.bf16.msra.mxu0 %v1751
  %1776 = vmatprep.subr.bf16.mxu0 0
  %1777 = vmatpush1.bf16.msra.mxu0 0
  %1778 = vmatprep.subr.bf16.mxu0 0
  %1779 = vmatpush1.bf16.msra.mxu0 0
  %1780 = vmatprep.subr.bf16.mxu0 0
  %1781 = vmatpush1.bf16.msra.mxu0 0
  %1782 = vmatprep.subr.bf16.mxu0 0
  %1783 = vmatpush1.bf16.msra.mxu0 0
  %1784 = vmatprep.subr.bf16.mxu0 0
  %1785 = vmatpush1.bf16.msra.mxu0 0
  %1786 = vmatprep.subr.bf16.mxu0 0
  %1787 = vmatpush1.bf16.msra.mxu0 0
  %1788 = vmatprep.subr.bf16.mxu0 0
  %1789 = vmatpush1.bf16.msra.mxu0 0
  %1790 = vmatprep.subr.bf16.mxu0 0
  %1791 = vmatpush1.bf16.msra.mxu0 0
  %1792 = vmatprep.mubr.bf16.mxu0 0
  %1793 = vmatmul.mubr.bf16.gmra.mrb[0].mxu0 %v1691
  %v1794 = vpop.f32.mrb[0].mxu0
  %v1795 = vadd.f32 %v1711, %v1794
  %v1796 = vpop.f32.mrb[0].mxu0
  %v1797 = vpop.f32.mrb[0].mxu0
  %v1798 = vadd.f32 %v1711, %v1797
  %v1799 = vpop.f32.mrb[0].mxu0
  %1800 = vdwg.mxu0
  %v1801 = vadd.f32 %v1565, %v1795
  %v1802 = vadd.f32 %v1566, %v1798
  %1803 = vst.msk [vmem:[%s8] sm:$0xff] %vm33, %v1801
  %1804 = vst.msk [vmem:[%s8 + $0x8] sm:$0xff] %vm33, %v1802
  // Predicated region
  $region34: #{_transformer_block_impl.1} parent=0 // pred_check
    _
  $region35: #{_transformer_block_impl.1} parent=0 // pred_check_branch
    %1806 = sbr.rel (0) target = $region37
  $region36: #{_transformer_block_impl.1} parent=0 // pred_region
    _
  $region37: #{_transformer_block_impl.1} parent=0 // pred_fallthru
    _
  // Predicated region
  $region38: #{_transformer_block_impl.1} parent=0 // pred_check
    _
  $region39: #{_transformer_block_impl.1} parent=0 // pred_check_branch
    %1808 = sbr.rel (0) target = $region41
  $region40: #{_transformer_block_impl.1} parent=0 // pred_region
    _
  $region41: #{_transformer_block_impl.1} parent=0 // pred_fallthru
    _

</llo_original>
